<compile_context>
chip_gen: v6e
topology: v6e:2x2x1
jax: 0.10.0
libtpu: 0.0.40
codegen_flags: <defaults>
</compile_context>

<pallas_src>
import jax
import jax.numpy as jnp
from jax.experimental import pallas as pl
from jax.experimental.pallas import tpu as pltpu

B = 16                               # batch per forward call (amortize launch)
TB = 8                               # batch block per grid step (multiple of 8)
CIN = 4
H = W = 16
KH = KW = 3
C_TRUNK = 32                         # trunk output size == embedder input size
HID = 64                             # embedder hidden width
EMB = 64                             # embedding vector size
EMB_PAD = 128                        # lane-dense output width (sliced to EMB)
HO, WO = H - KH + 1, W - KW + 1      # 14, 14
P = HO * WO                          # 196 valid spatial positions per image
P_PAD = 256                          # P rounded up to a lane multiple (128)
KP = KH * KW * CIN                   # 36  (fused conv contraction length)

assert B % TB == 0 and TB % 8 == 0


def recog_kernel(p_ref, wt_ref, bc_ref, pool_ref, w1_ref, b1_ref, w2_ref,
                 b2_ref, o_ref):
    """Fused trunk (conv3x3 + bias + ReLU + GAP) + MLP embedder, one batch block.

    p_ref:    (KP, TB*P_PAD)     im2col patches, channel-major (lanes = positions)
    wt_ref:   (C_TRUNK, KP)      conv weight, transposed
    bc_ref:   (C_TRUNK, 1)       conv bias (column)
    pool_ref: (TB, TB*P_PAD)     constant pooling matrix, 1/P on valid positions
    w1_ref:   (C_TRUNK, HID)     b1_ref: (1, HID)
    w2_ref:   (HID, EMB_PAD)     b2_ref: (1, EMB_PAD)   (zero-padded to 128 lanes)
    o_ref:    (TB, EMB_PAD)
    """
    # --- trunk conv: ONE K=36 contraction, large N on the MXU column axis ----
    y = jnp.maximum(
        jnp.dot(wt_ref[...], p_ref[...], preferred_element_type=jnp.float32)
        + bc_ref[...], 0.0)                                   # (32, TB*P_PAD)

    # --- global average pool: constant mask (1/P folded, 0 on padded cols) ---
    # NT-style contraction (pool_t @ y^T): result lands directly as (TB, 32),
    # so no in-kernel transpose is needed anywhere.
    feats = jax.lax.dot_general(
        pool_ref[...], y, (((1,), (1,)), ((), ())),
        preferred_element_type=jnp.float32)                   # (TB, 32)

    # --- MLP embedder: Linear -> ReLU -> Linear (lane-dense single store) ----
    h = jnp.maximum(
        jnp.dot(feats, w1_ref[...], preferred_element_type=jnp.float32)
        + b1_ref[...], 0.0)                                   # (TB, HID)
    o_ref[...] = (jnp.dot(h, w2_ref[...], preferred_element_type=jnp.float32)
                  + b2_ref[...])                              # (TB, EMB_PAD)


def pack_params(params):
    """One-time weight / constant layout prep (analogous to checkpoint loading)."""
    w_conv, b_conv, w1, b1, w2, b2 = params
    wt_c = jnp.transpose(w_conv)                              # (C_TRUNK, KP)
    bc_col = b_conv.reshape(C_TRUNK, 1)
    # Pooling matrix: row b picks the P valid positions of local image b and
    # averages them; padded columns (relu(bias) junk) get weight 0.
    pos = jnp.arange(TB * P_PAD)
    img = pos // P_PAD
    valid = (pos % P_PAD) < P
    pool_t = jnp.where(
        (img[None, :] == jnp.arange(TB)[:, None]) & valid[None, :],
        1.0 / P, 0.0).astype(jnp.float32)                     # (TB, TB*P_PAD)
    w2p = jnp.zeros((HID, EMB_PAD), w2.dtype).at[:, :EMB].set(w2)
    b2p = jnp.zeros((1, EMB_PAD), b2.dtype).at[:, :EMB].set(b2)
    return wt_c, bc_col, pool_t, w1, b1, w2p, b2p


@jax.jit
def recognition_forward(x_nchw, packed):
    """RecognitionBase.forward: embedder(trunk(x)), one fused Pallas kernel."""
    wt_c, bc_col, pool_t, w1, b1, w2p, b2p = packed

    # Cheap XLA glue: im2col (tiny) so the kernel sees a single K=36,
    # channel-major contraction instead of 9 unaligned-sliced K=4 dots.
    x_nhwc = jnp.transpose(x_nchw, (0, 2, 3, 1))              # (B, H, W, CIN)
    cols = [x_nhwc[:, i:i + HO, j:j + WO, :]
            for i in range(KH) for j in range(KW)]
    patches = jnp.concatenate(cols, axis=-1).reshape(B, P, KP)  # (B, 196, 36)
    patches = jnp.pad(patches, ((0, 0), (0, P_PAD - P), (0, 0)))  # (B, 256, 36)
    patches_t = jnp.transpose(patches, (2, 0, 1)).reshape(KP, B * P_PAD)

    out_pad = pl.pallas_call(
        recog_kernel,
        out_shape=jax.ShapeDtypeStruct((B, EMB_PAD), jnp.float32),
        grid=(B // TB,),
        in_specs=[
            pl.BlockSpec((KP, TB * P_PAD), lambda i: (0, i)),   # patches block
            pl.BlockSpec((C_TRUNK, KP), lambda i: (0, 0)),      # conv weight
            pl.BlockSpec((C_TRUNK, 1), lambda i: (0, 0)),       # conv bias
            pl.BlockSpec((TB, TB * P_PAD), lambda i: (0, 0)),   # pool matrix
            pl.BlockSpec((C_TRUNK, HID), lambda i: (0, 0)),     # w1
            pl.BlockSpec((1, HID), lambda i: (0, 0)),           # b1
            pl.BlockSpec((HID, EMB_PAD), lambda i: (0, 0)),     # w2 (padded)
            pl.BlockSpec((1, EMB_PAD), lambda i: (0, 0)),       # b2 (padded)
        ],
        out_specs=pl.BlockSpec((TB, EMB_PAD), lambda i: (i, 0)),
        compiler_params=pltpu.CompilerParams(
            dimension_semantics=("parallel",)),   # batch grid: both TCs on v7x
    )(patches_t, wt_c, bc_col, pool_t, w1, b1, w2p, b2p)
    return out_pad[:, :EMB]


def reference_forward(x_nchw, params):
    """Pure-JAX reference mirroring the PyTorch NCHW conv semantics."""
    w_conv, b_conv, w1, b1, w2, b2 = params
    w_hwio = w_conv.reshape(KH, KW, CIN, C_TRUNK)
    w_oihw = jnp.transpose(w_hwio, (3, 2, 0, 1))
    y = jax.lax.conv_general_dilated(
        x_nchw, w_oihw, window_strides=(1, 1), padding="VALID",
        dimension_numbers=("NCHW", "OIHW", "NCHW"))
    y = y + b_conv.reshape(1, C_TRUNK, 1, 1)
    y = jnp.maximum(y, 0.0)
    feats = jnp.mean(y, axis=(2, 3))
    h = jnp.maximum(feats @ w1 + b1, 0.0)
    return h @ w2 + b2


if __name__ == "__main__":
    key = jax.random.PRNGKey(0)
    ks = jax.random.split(key, 7)
    x = jax.random.normal(ks[0], (B, CIN, H, W), jnp.float32)

    # Deterministic synthetic parameters (shapes implied by the module design).
    # TODO(synk): load_checkpoint (.pth state-dict key remapping) is host-side
    # file I/O and is not represented in the kernel path.
    w_conv = (jax.random.normal(ks[1], (KH, KW, CIN, C_TRUNK), jnp.float32)
              * 0.1).reshape(KP, C_TRUNK)
    b_conv = jax.random.normal(ks[2], (1, C_TRUNK), jnp.float32) * 0.01
    w1 = jax.random.normal(ks[3], (C_TRUNK, HID), jnp.float32) * 0.1
    b1 = jax.random.normal(ks[4], (1, HID), jnp.float32) * 0.01
    w2 = jax.random.normal(ks[5], (HID, EMB), jnp.float32) * 0.1
    b2 = jax.random.normal(ks[6], (1, EMB), jnp.float32) * 0.01
    params = (w_conv, b_conv, w1, b1, w2, b2)
    packed = pack_params(params)          # one-time layout prep, outside jit

    out = jax.block_until_ready(recognition_forward(x, packed))
    ref = reference_forward(x, params)

    assert out.shape == (B, EMB), out.shape
    # f32 matmuls on the MXU use multi-pass reduced-precision accumulation;
    # allow a small tolerance vs the XLA conv reference.
    assert jnp.allclose(out, ref, atol=1e-3, rtol=1e-3), float(
        jnp.max(jnp.abs(out - ref)))
    print("KERNEL_OK")
</pallas_src>

<mosaic_0001>
module attributes {stable_mosaic.version = 11 : i64} {
  func.func @recog_kernel(%arg0: i32, %arg1: memref<36x2048xf32, #tpu.memory_space<vmem>>, %arg2: memref<32x36xf32, #tpu.memory_space<vmem>>, %arg3: memref<32x1xf32, #tpu.memory_space<vmem>>, %arg4: memref<8x2048xf32, #tpu.memory_space<vmem>>, %arg5: memref<32x64xf32, #tpu.memory_space<vmem>>, %arg6: memref<1x64xf32, #tpu.memory_space<vmem>>, %arg7: memref<64x128xf32, #tpu.memory_space<vmem>>, %arg8: memref<1x128xf32, #tpu.memory_space<vmem>>, %arg9: memref<8x128xf32, #tpu.memory_space<vmem>>) attributes {dimension_semantics = [#tpu.dimension_semantics<parallel>], iteration_bounds = array<i64: 2>, scalar_prefetch = 0 : i64, scratch_operands = 0 : i64, tpu.core_type = #tpu.core_type<tc>, window_params = [{transform_indices = @transform_0, window_bounds = array<i64: 36, 2048>}, {pipeline_mode = #tpu.pipeline_mode<synchronous>, transform_indices = @transform_1, window_bounds = array<i64: 32, 36>}, {pipeline_mode = #tpu.pipeline_mode<synchronous>, transform_indices = @transform_2, window_bounds = array<i64: 32, 1>}, {pipeline_mode = #tpu.pipeline_mode<synchronous>, transform_indices = @transform_3, window_bounds = array<i64: 8, 2048>}, {pipeline_mode = #tpu.pipeline_mode<synchronous>, transform_indices = @transform_4, window_bounds = array<i64: 32, 64>}, {pipeline_mode = #tpu.pipeline_mode<synchronous>, transform_indices = @transform_5, window_bounds = array<i64: 1, 64>}, {pipeline_mode = #tpu.pipeline_mode<synchronous>, transform_indices = @transform_6, window_bounds = array<i64: 64, 128>}, {pipeline_mode = #tpu.pipeline_mode<synchronous>, transform_indices = @transform_7, window_bounds = array<i64: 1, 128>}, {transform_indices = @transform_8, window_bounds = array<i64: 8, 128>}]} {
    %c0 = arith.constant 0 : index
    %c0_0 = arith.constant 0 : index
    %0 = vector.load %arg2[%c0, %c0_0] : memref<32x36xf32, #tpu.memory_space<vmem>>, vector<32x36xf32>
    %c0_1 = arith.constant 0 : index
    %c0_2 = arith.constant 0 : index
    %1 = vector.load %arg1[%c0_1, %c0_2] : memref<36x2048xf32, #tpu.memory_space<vmem>>, vector<36x2048xf32>
    %cst = arith.constant dense<0.000000e+00> : vector<32x2048xf32>
    %2 = tpu.matmul %0, %1, %cst {dimension_numbers = #tpu.dot_dimension_numbers<[1], [0], [0], [1], [0, 0, 1, 1], [], []>} : vector<32x36xf32>, vector<36x2048xf32>, vector<32x2048xf32> -> vector<32x2048xf32>
    %c0_3 = arith.constant 0 : index
    %c0_4 = arith.constant 0 : index
    %3 = vector.load %arg3[%c0_3, %c0_4] : memref<32x1xf32, #tpu.memory_space<vmem>>, vector<32x1xf32>
    %4 = vector.broadcast %3 : vector<32x1xf32> to vector<32x2048xf32>
    %5 = arith.addf %2, %4 : vector<32x2048xf32>
    %cst_5 = arith.constant 0.000000e+00 : f32
    %6 = vector.broadcast %cst_5 : f32 to vector<32x2048xf32>
    %7 = arith.maximumf %5, %6 : vector<32x2048xf32>
    %c0_6 = arith.constant 0 : index
    %c0_7 = arith.constant 0 : index
    %8 = vector.load %arg4[%c0_6, %c0_7] : memref<8x2048xf32, #tpu.memory_space<vmem>>, vector<8x2048xf32>
    %cst_8 = arith.constant dense<0.000000e+00> : vector<8x32xf32>
    %9 = tpu.matmul %8, %7, %cst_8 {dimension_numbers = #tpu.dot_dimension_numbers<[1], [1], [0], [0], [0, 0, 1, 0], [], []>} : vector<8x2048xf32>, vector<32x2048xf32>, vector<8x32xf32> -> vector<8x32xf32>
    %c0_9 = arith.constant 0 : index
    %c0_10 = arith.constant 0 : index
    %10 = vector.load %arg5[%c0_9, %c0_10] : memref<32x64xf32, #tpu.memory_space<vmem>>, vector<32x64xf32>
    %cst_11 = arith.constant dense<0.000000e+00> : vector<8x64xf32>
    %11 = tpu.matmul %9, %10, %cst_11 {dimension_numbers = #tpu.dot_dimension_numbers<[1], [0], [0], [1], [0, 0, 1, 1], [], []>} : vector<8x32xf32>, vector<32x64xf32>, vector<8x64xf32> -> vector<8x64xf32>
    %c0_12 = arith.constant 0 : index
    %c0_13 = arith.constant 0 : index
    %12 = vector.load %arg6[%c0_12, %c0_13] : memref<1x64xf32, #tpu.memory_space<vmem>>, vector<1x64xf32>
    %13 = vector.broadcast %12 : vector<1x64xf32> to vector<8x64xf32>
    %14 = arith.addf %11, %13 : vector<8x64xf32>
    %cst_14 = arith.constant 0.000000e+00 : f32
    %15 = vector.broadcast %cst_14 : f32 to vector<8x64xf32>
    %16 = arith.maximumf %14, %15 : vector<8x64xf32>
    %c0_15 = arith.constant 0 : index
    %c0_16 = arith.constant 0 : index
    %17 = vector.load %arg7[%c0_15, %c0_16] : memref<64x128xf32, #tpu.memory_space<vmem>>, vector<64x128xf32>
    %cst_17 = arith.constant dense<0.000000e+00> : vector<8x128xf32>
    %18 = tpu.matmul %16, %17, %cst_17 {dimension_numbers = #tpu.dot_dimension_numbers<[1], [0], [0], [1], [0, 0, 1, 1], [], []>} : vector<8x64xf32>, vector<64x128xf32>, vector<8x128xf32> -> vector<8x128xf32>
    %c0_18 = arith.constant 0 : index
    %c0_19 = arith.constant 0 : index
    %19 = vector.load %arg8[%c0_18, %c0_19] : memref<1x128xf32, #tpu.memory_space<vmem>>, vector<1x128xf32>
    %20 = vector.broadcast %19 : vector<1x128xf32> to vector<8x128xf32>
    %21 = arith.addf %18, %20 : vector<8x128xf32>
    %c0_20 = arith.constant 0 : index
    %c0_21 = arith.constant 0 : index
    %22 = vector.load %arg9[%c0_20, %c0_21] : memref<8x128xf32, #tpu.memory_space<vmem>>, vector<8x128xf32>
    tpu.vector_store %arg9[%c0_20, %c0_21], %21 {strides = array<i32>} : memref<8x128xf32, #tpu.memory_space<vmem>>, vector<8x128xf32>,
    return
  }
  func.func @transform_0(%arg0: i32) -> (i32, i32) {
    %c0_i32 = arith.constant 0 : i32
    %c0_i32_0 = arith.constant 0 : i32
    return %c0_i32, %arg0 : i32, i32
  }
  func.func @transform_1(%arg0: i32) -> (i32, i32) {
    %c0_i32 = arith.constant 0 : i32
    %c0_i32_0 = arith.constant 0 : i32
    %c0_i32_1 = arith.constant 0 : i32
    return %c0_i32, %c0_i32_0 : i32, i32
  }
  func.func @transform_2(%arg0: i32) -> (i32, i32) {
    %c0_i32 = arith.constant 0 : i32
    %c0_i32_0 = arith.constant 0 : i32
    %c0_i32_1 = arith.constant 0 : i32
    return %c0_i32, %c0_i32_0 : i32, i32
  }
  func.func @transform_3(%arg0: i32) -> (i32, i32) {
    %c0_i32 = arith.constant 0 : i32
    %c0_i32_0 = arith.constant 0 : i32
    %c0_i32_1 = arith.constant 0 : i32
    return %c0_i32, %c0_i32_0 : i32, i32
  }
  func.func @transform_4(%arg0: i32) -> (i32, i32) {
    %c0_i32 = arith.constant 0 : i32
    %c0_i32_0 = arith.constant 0 : i32
    %c0_i32_1 = arith.constant 0 : i32
    return %c0_i32, %c0_i32_0 : i32, i32
  }
  func.func @transform_5(%arg0: i32) -> (i32, i32) {
    %c0_i32 = arith.constant 0 : i32
    %c0_i32_0 = arith.constant 0 : i32
    %c0_i32_1 = arith.constant 0 : i32
    return %c0_i32, %c0_i32_0 : i32, i32
  }
  func.func @transform_6(%arg0: i32) -> (i32, i32) {
    %c0_i32 = arith.constant 0 : i32
    %c0_i32_0 = arith.constant 0 : i32
    %c0_i32_1 = arith.constant 0 : i32
    return %c0_i32, %c0_i32_0 : i32, i32
  }
  func.func @transform_7(%arg0: i32) -> (i32, i32) {
    %c0_i32 = arith.constant 0 : i32
    %c0_i32_0 = arith.constant 0 : i32
    %c0_i32_1 = arith.constant 0 : i32
    return %c0_i32, %c0_i32_0 : i32, i32
  }
  func.func @transform_8(%arg0: i32) -> (i32, i32) {
    %c0_i32 = arith.constant 0 : i32
    %c0_i32_0 = arith.constant 0 : i32
    return %arg0, %c0_i32 : i32, i32
  }
}

</mosaic_0001>

<llo_original>
// kernel: recognition_forward.1
$region0: #{recognition_forward.1}
  #allocation0 [shape = 'u32[]', space=smem, size = 0x4, offset = 0x4, fixed_abs, tag = 'smem constant byte address 0x4 - core index']
  #allocation1 [shape = 'u32[144,128]{1,0:T(1,128)}', space=vmem, size = 0x12000, scoped, tag = 'internal scratch']
  %s0 = inlined_call_operand.vmem [shape: f32[36,4096], index: 0, kind: input, shape index: {}]
  %s1 = inlined_call_operand.vmem [shape: f32[32,36], index: 1, kind: input, shape index: {}]
  %s2 = inlined_call_operand.vmem [shape: f32[32,1], index: 2, kind: input, shape index: {}]
  %s3 = inlined_call_operand.vmem [shape: f32[8,2048], index: 3, kind: input, shape index: {}]
  %s4 = inlined_call_operand.vmem [shape: f32[32,64], index: 4, kind: input, shape index: {}]
  %s5 = inlined_call_operand.vmem [shape: f32[1,64], index: 5, kind: input, shape index: {}]
  %s6 = inlined_call_operand.vmem [shape: f32[64,128], index: 6, kind: input, shape index: {}]
  %s7 = inlined_call_operand.vmem [shape: f32[1,128], index: 7, kind: input, shape index: {}]
  %s8 = inlined_call_operand.hbm [shape: f32[16,128], index: 8, kind: output, shape index: {}]
  %s9 = sld [smem:[#allocation0]]
  $region88: #{recognition_forward.1} parent=0
    _
  %s11 = ssub.s32 1, %s9
  %s12 = scalar_select 0, %s11, %s9
  $region1: #{recognition_forward.1} parent=0
    #allocation2 [shape = 'u8[655360]{0}', space=vmem, size = 0xa0000, scoped, tag = 'input window, operand 0']
    #allocation3 [shape = 'u8[8192]{0}', space=vmem, size = 0x2000, scoped, tag = 'output window, operand 0']
    #allocation4 [shape = 's32[2]{0}', space=sflag, size = 0x8, scoped, tag = 'scoped memory for recognition_forward.1']
    %13 = vsyncpa [#allocation4], 0
    %s14 = scalar_lea.sflag [#allocation4], 1
    %15 = vsyncpa %s14, 0
    loop: start=0, step=1, limit=4
    $region2: #{recognition_forward.1} parent=1 // loop_pre_header
      _
    $region3: #{recognition_forward.1} parent=1 // loop_header
      %s17 = sphi 0, %s21
      %p18 = scmp.ge.s32.totalorder %s17, 4
      %s27 = sphi 0, %s29
      %s30 = sphi 0, %s27
      %s31 = sphi 0, %s30
      %s47 = sphi 0, %s31
      %s51 = sphi 0, %s51
      %s53 = sphi 0, %s51
      %s54 = sphi 0, %s53
      %s68 = sphi 0, %s54
      %s72 = sphi 0, %s72
      %s74 = sphi 0, %s72
      %s75 = sphi 0, %s74
      %s89 = sphi 0, %s75
      %s93 = sphi 0, %s93
      %s95 = sphi 0, %s93
      %s96 = sphi 0, %s95
      %s110 = sphi 0, %s96
      %s114 = sphi 0, %s114
      %s116 = sphi 0, %s114
      %s117 = sphi 0, %s116
      %s131 = sphi 0, %s117
      %s135 = sphi 0, %s135
      %s137 = sphi 0, %s135
      %s138 = sphi 0, %s137
      %s152 = sphi 0, %s138
      %s156 = sphi 0, %s156
      %s158 = sphi 0, %s156
      %s159 = sphi 0, %s158
      %s173 = sphi 0, %s159
      %s177 = sphi 0, %s177
      %s179 = sphi 0, %s177
      %s180 = sphi 0, %s179
      %s194 = sphi 0, %s180
      %s200 = sphi 0, %s202
      %s203 = sphi 0, %s200
      %s204 = sphi 0, %s203
      %s220 = sphi 0, %s204
    $region4: #{recognition_forward.1} parent=1 // loop_header_branch
      %20 = sbr.rel (%p18) target = $region8
    $region5: #{recognition_forward.1} parent=1 // loop_body
      %s22 = ssub.s32 %s17, 1
      %s23 = ssub.s32 %s17, 2
      %s24 = sadd.s32 %s17, 1
      %s25 = ssub.s32 %s17, %s24
      %p26 = scmp.eq.s32.totalorder %s25, 0
      %s28 = sadd.s32 %s27, 1
      %s29 = scalar_select %p26, %s27, %s28
      %p32 = pneg %p26
      %p33 = scmp.eq.s32.totalorder %s17, 1
      %p34 = por %p32, %p33
      %p35 = scmp.ne.s32.totalorder %s27, %s30
      %p36 = scmp.eq.s32.totalorder %s17, 0
      %p37 = por %p35, %p36
      %p38 = scmp.ne.s32.totalorder %s27, %s30
      %p39 = scmp.eq.s32.totalorder %s22, 1
      %p40 = por %p38, %p39
      %p41 = scmp.ne.s32.totalorder %s30, %s31
      %p42 = scmp.eq.s32.totalorder %s22, 0
      %p43 = por %p41, %p42
      %p44 = scmp.ne.s32.totalorder %s30, %s31
      %p45 = scmp.eq.s32.totalorder %s23, 1
      %p46 = por %p44, %p45
      %p48 = scmp.ne.s32.totalorder %s31, %s47
      %p49 = scmp.eq.s32.totalorder %s23, 0
      %p50 = por %p48, %p49
      %s52 = sadd.s32 %s51, 1
      %p55 = scmp.eq.s32.totalorder %s17, 1
      %p56 = scmp.ne.s32.totalorder %s51, %s53
      %p57 = scmp.eq.s32.totalorder %s17, 0
      %p58 = por %p56, %p57
      %p59 = scmp.ne.s32.totalorder %s51, %s53
      %p60 = scmp.eq.s32.totalorder %s22, 1
      %p61 = por %p59, %p60
      %p62 = scmp.ne.s32.totalorder %s53, %s54
      %p63 = scmp.eq.s32.totalorder %s22, 0
      %p64 = por %p62, %p63
      %p65 = scmp.ne.s32.totalorder %s53, %s54
      %p66 = scmp.eq.s32.totalorder %s23, 1
      %p67 = por %p65, %p66
      %p69 = scmp.ne.s32.totalorder %s54, %s68
      %p70 = scmp.eq.s32.totalorder %s23, 0
      %p71 = por %p69, %p70
      %s73 = sadd.s32 %s72, 1
      %p76 = scmp.eq.s32.totalorder %s17, 1
      %p77 = scmp.ne.s32.totalorder %s72, %s74
      %p78 = scmp.eq.s32.totalorder %s17, 0
      %p79 = por %p77, %p78
      %p80 = scmp.ne.s32.totalorder %s72, %s74
      %p81 = scmp.eq.s32.totalorder %s22, 1
      %p82 = por %p80, %p81
      %p83 = scmp.ne.s32.totalorder %s74, %s75
      %p84 = scmp.eq.s32.totalorder %s22, 0
      %p85 = por %p83, %p84
      %p86 = scmp.ne.s32.totalorder %s74, %s75
      %p87 = scmp.eq.s32.totalorder %s23, 1
      %p88 = por %p86, %p87
      %p90 = scmp.ne.s32.totalorder %s75, %s89
      %p91 = scmp.eq.s32.totalorder %s23, 0
      %p92 = por %p90, %p91
      %s94 = sadd.s32 %s93, 1
      %p97 = scmp.eq.s32.totalorder %s17, 1
      %p98 = scmp.ne.s32.totalorder %s93, %s95
      %p99 = scmp.eq.s32.totalorder %s17, 0
      %p100 = por %p98, %p99
      %p101 = scmp.ne.s32.totalorder %s93, %s95
      %p102 = scmp.eq.s32.totalorder %s22, 1
      %p103 = por %p101, %p102
      %p104 = scmp.ne.s32.totalorder %s95, %s96
      %p105 = scmp.eq.s32.totalorder %s22, 0
      %p106 = por %p104, %p105
      %p107 = scmp.ne.s32.totalorder %s95, %s96
      %p108 = scmp.eq.s32.totalorder %s23, 1
      %p109 = por %p107, %p108
      %p111 = scmp.ne.s32.totalorder %s96, %s110
      %p112 = scmp.eq.s32.totalorder %s23, 0
      %p113 = por %p111, %p112
      %s115 = sadd.s32 %s114, 1
      %p118 = scmp.eq.s32.totalorder %s17, 1
      %p119 = scmp.ne.s32.totalorder %s114, %s116
      %p120 = scmp.eq.s32.totalorder %s17, 0
      %p121 = por %p119, %p120
      %p122 = scmp.ne.s32.totalorder %s114, %s116
      %p123 = scmp.eq.s32.totalorder %s22, 1
      %p124 = por %p122, %p123
      %p125 = scmp.ne.s32.totalorder %s116, %s117
      %p126 = scmp.eq.s32.totalorder %s22, 0
      %p127 = por %p125, %p126
      %p128 = scmp.ne.s32.totalorder %s116, %s117
      %p129 = scmp.eq.s32.totalorder %s23, 1
      %p130 = por %p128, %p129
      %p132 = scmp.ne.s32.totalorder %s117, %s131
      %p133 = scmp.eq.s32.totalorder %s23, 0
      %p134 = por %p132, %p133
      %s136 = sadd.s32 %s135, 1
      %p139 = scmp.eq.s32.totalorder %s17, 1
      %p140 = scmp.ne.s32.totalorder %s135, %s137
      %p141 = scmp.eq.s32.totalorder %s17, 0
      %p142 = por %p140, %p141
      %p143 = scmp.ne.s32.totalorder %s135, %s137
      %p144 = scmp.eq.s32.totalorder %s22, 1
      %p145 = por %p143, %p144
      %p146 = scmp.ne.s32.totalorder %s137, %s138
      %p147 = scmp.eq.s32.totalorder %s22, 0
      %p148 = por %p146, %p147
      %p149 = scmp.ne.s32.totalorder %s137, %s138
      %p150 = scmp.eq.s32.totalorder %s23, 1
      %p151 = por %p149, %p150
      %p153 = scmp.ne.s32.totalorder %s138, %s152
      %p154 = scmp.eq.s32.totalorder %s23, 0
      %p155 = por %p153, %p154
      %s157 = sadd.s32 %s156, 1
      %p160 = scmp.eq.s32.totalorder %s17, 1
      %p161 = scmp.ne.s32.totalorder %s156, %s158
      %p162 = scmp.eq.s32.totalorder %s17, 0
      %p163 = por %p161, %p162
      %p164 = scmp.ne.s32.totalorder %s156, %s158
      %p165 = scmp.eq.s32.totalorder %s22, 1
      %p166 = por %p164, %p165
      %p167 = scmp.ne.s32.totalorder %s158, %s159
      %p168 = scmp.eq.s32.totalorder %s22, 0
      %p169 = por %p167, %p168
      %p170 = scmp.ne.s32.totalorder %s158, %s159
      %p171 = scmp.eq.s32.totalorder %s23, 1
      %p172 = por %p170, %p171
      %p174 = scmp.ne.s32.totalorder %s159, %s173
      %p175 = scmp.eq.s32.totalorder %s23, 0
      %p176 = por %p174, %p175
      %s178 = sadd.s32 %s177, 1
      %p181 = scmp.eq.s32.totalorder %s17, 1
      %p182 = scmp.ne.s32.totalorder %s177, %s179
      %p183 = scmp.eq.s32.totalorder %s17, 0
      %p184 = por %p182, %p183
      %p185 = scmp.ne.s32.totalorder %s177, %s179
      %p186 = scmp.eq.s32.totalorder %s22, 1
      %p187 = por %p185, %p186
      %p188 = scmp.ne.s32.totalorder %s179, %s180
      %p189 = scmp.eq.s32.totalorder %s22, 0
      %p190 = por %p188, %p189
      %p191 = scmp.ne.s32.totalorder %s179, %s180
      %p192 = scmp.eq.s32.totalorder %s23, 1
      %p193 = por %p191, %p192
      %p195 = scmp.ne.s32.totalorder %s180, %s194
      %p196 = scmp.eq.s32.totalorder %s23, 0
      %p197 = por %p195, %p196
      %s198 = ssub.s32 %s17, %s24
      %p199 = scmp.eq.s32.totalorder %s198, 0
      %s201 = sadd.s32 %s200, 1
      %s202 = scalar_select %p199, %s200, %s201
      %p205 = pneg %p199
      %p206 = scmp.eq.s32.totalorder %s17, 1
      %p207 = por %p205, %p206
      %p208 = scmp.ne.s32.totalorder %s200, %s203
      %p209 = scmp.eq.s32.totalorder %s17, 0
      %p210 = por %p208, %p209
      %p211 = scmp.ne.s32.totalorder %s200, %s203
      %p212 = scmp.eq.s32.totalorder %s22, 1
      %p213 = por %p211, %p212
      %p214 = scmp.ne.s32.totalorder %s203, %s204
      %p215 = scmp.eq.s32.totalorder %s22, 0
      %p216 = por %p214, %p215
      %p217 = scmp.ne.s32.totalorder %s203, %s204
      %p218 = scmp.eq.s32.totalorder %s23, 1
      %p219 = por %p217, %p218
      %p221 = scmp.ne.s32.totalorder %s204, %s220
      %p222 = scmp.eq.s32.totalorder %s23, 0
      %p223 = por %p221, %p222
      %p224 = scmp.le.s32.totalorder 1, %s17
      %p225 = scmp.lt.s32.totalorder %s17, 3
      %p226 = pnand %p224, %p225
      %p227 = pneg %p226
      // Predicated region
      $region9: #{recognition_forward.1} parent=5 // pred_check
        _
      $region10: #{recognition_forward.1} parent=5 // pred_check_branch
        %229 = sbr.rel (%p226) target = $region12
      $region11: #{recognition_forward.1} parent=5 // pred_region
        %s230 = ssub.s32 %s17, 1
        // Predicated region
        $region13: #{recognition_forward.1} parent=11 // pred_check
          %p231 = pneg %p64
        $region14: #{recognition_forward.1} parent=11 // pred_check_branch
          %233 = sbr.rel (%p231) target = $region16
        $region15: #{recognition_forward.1} parent=11 // pred_region
          _
        $region16: #{recognition_forward.1} parent=11 // pred_fallthru
          _
        // Predicated region
        $region17: #{recognition_forward.1} parent=11 // pred_check
          %p234 = pneg %p85
        $region18: #{recognition_forward.1} parent=11 // pred_check_branch
          %236 = sbr.rel (%p234) target = $region20
        $region19: #{recognition_forward.1} parent=11 // pred_region
          _
        $region20: #{recognition_forward.1} parent=11 // pred_fallthru
          _
        // Predicated region
        $region21: #{recognition_forward.1} parent=11 // pred_check
          %p237 = pneg %p106
        $region22: #{recognition_forward.1} parent=11 // pred_check_branch
          %239 = sbr.rel (%p237) target = $region24
        $region23: #{recognition_forward.1} parent=11 // pred_region
          _
        $region24: #{recognition_forward.1} parent=11 // pred_fallthru
          _
        // Predicated region
        $region25: #{recognition_forward.1} parent=11 // pred_check
          %p240 = pneg %p127
        $region26: #{recognition_forward.1} parent=11 // pred_check_branch
          %242 = sbr.rel (%p240) target = $region28
        $region27: #{recognition_forward.1} parent=11 // pred_region
          _
        $region28: #{recognition_forward.1} parent=11 // pred_fallthru
          _
        // Predicated region
        $region29: #{recognition_forward.1} parent=11 // pred_check
          %p243 = pneg %p148
        $region30: #{recognition_forward.1} parent=11 // pred_check_branch
          %245 = sbr.rel (%p243) target = $region32
        $region31: #{recognition_forward.1} parent=11 // pred_region
          _
        $region32: #{recognition_forward.1} parent=11 // pred_fallthru
          _
        // Predicated region
        $region33: #{recognition_forward.1} parent=11 // pred_check
          %p246 = pneg %p169
        $region34: #{recognition_forward.1} parent=11 // pred_check_branch
          %248 = sbr.rel (%p246) target = $region36
        $region35: #{recognition_forward.1} parent=11 // pred_region
          _
        $region36: #{recognition_forward.1} parent=11 // pred_fallthru
          _
        // Predicated region
        $region37: #{recognition_forward.1} parent=11 // pred_check
          %p249 = pneg %p190
        $region38: #{recognition_forward.1} parent=11 // pred_check_branch
          %251 = sbr.rel (%p249) target = $region40
        $region39: #{recognition_forward.1} parent=11 // pred_region
          _
        $region40: #{recognition_forward.1} parent=11 // pred_fallthru
          _
      $region12: #{recognition_forward.1} parent=5 // pred_fallthru
        _
      %p252 = scmp.lt.s32.totalorder %s17, 2
      // Predicated region
      $region41: #{recognition_forward.1} parent=5 // pred_check
        %p253 = pneg %p252
      $region42: #{recognition_forward.1} parent=5 // pred_check_branch
        %255 = sbr.rel (%p253) target = $region44
      $region43: #{recognition_forward.1} parent=5 // pred_region
        // Predicated region
        $region45: #{recognition_forward.1} parent=43 // pred_check
          %p256 = pneg %p37
        $region46: #{recognition_forward.1} parent=43 // pred_check_branch
          %258 = sbr.rel (%p256) target = $region48
        $region47: #{recognition_forward.1} parent=43 // pred_region
          %s259 = sand.u32 %s27, 1
          %s260 = sand.u32 %s27, 1
          %s261 = smul.addr %s260, 640
          %s262 = scalar_lea.vmem [#allocation2], %s261
          %s263 = smul.u32 16, %s17
          %s264 = smul.addr %s263, 8
          %s265 = scalar_lea.vmem %s0, %s264
          // Predicated region
          $region49: #{recognition_forward.1} parent=47 // pred_check
            _
          $region50: #{recognition_forward.1} parent=47 // pred_check_branch
            %267 = sbr.rel (0) target = $region52
          $region51: #{recognition_forward.1} parent=47 // pred_region
            // Predicated region
            $region53: #{recognition_forward.1} parent=51 // pred_check
              _
            $region54: #{recognition_forward.1} parent=51 // pred_check_branch
              %269 = sbr.rel (0) target = $region56
            $region55: #{recognition_forward.1} parent=51 // pred_region
              loop: start=0, step=1, limit=1
              $region57: #{recognition_forward.1} parent=55 // loop_pre_header
                _
              $region58: #{recognition_forward.1} parent=55 // loop_header
                %s271 = sphi 0, %s275
                %p272 = scmp.ge.s32.totalorder %s271, 1
                %s276 = sphi %s265, %s265
                %s277 = sphi %s262, %s262
              $region59: #{recognition_forward.1} parent=55 // loop_header_branch
                %274 = sbr.rel (%p272) target = $region63
              $region60: #{recognition_forward.1} parent=55 // loop_body
                %v278 = vld [vmem:[%s276] sm:$0xff]
                %279 = vst [vmem:[%s277] sm:$0xff] %v278
                %v280 = vld [vmem:[%s276 + $0x8] sm:$0xff]
                %281 = vst [vmem:[%s277 + $0x8] sm:$0xff] %v280
                %v282 = vld [vmem:[%s276 + $0x10] sm:$0xff]
                %283 = vst [vmem:[%s277 + $0x10] sm:$0xff] %v282
                %v284 = vld [vmem:[%s276 + $0x18] sm:$0xff]
                %285 = vst [vmem:[%s277 + $0x18] sm:$0xff] %v284
                %v286 = vld [vmem:[%s276 + $0x20] sm:$0xff]
                %287 = vst [vmem:[%s277 + $0x20] sm:$0xff] %v286
                %v288 = vld [vmem:[%s276 + $0x28] sm:$0xff]
                %289 = vst [vmem:[%s277 + $0x28] sm:$0xff] %v288
                %v290 = vld [vmem:[%s276 + $0x30] sm:$0xff]
                %291 = vst [vmem:[%s277 + $0x30] sm:$0xff] %v290
                %v292 = vld [vmem:[%s276 + $0x38] sm:$0xff]
                %293 = vst [vmem:[%s277 + $0x38] sm:$0xff] %v292
                %v294 = vld [vmem:[%s276 + $0x40] sm:$0xff]
                %295 = vst [vmem:[%s277 + $0x40] sm:$0xff] %v294
                %v296 = vld [vmem:[%s276 + $0x48] sm:$0xff]
                %297 = vst [vmem:[%s277 + $0x48] sm:$0xff] %v296
                %v298 = vld [vmem:[%s276 + $0x50] sm:$0xff]
                %299 = vst [vmem:[%s277 + $0x50] sm:$0xff] %v298
                %v300 = vld [vmem:[%s276 + $0x58] sm:$0xff]
                %301 = vst [vmem:[%s277 + $0x58] sm:$0xff] %v300
                %v302 = vld [vmem:[%s276 + $0x60] sm:$0xff]
                %303 = vst [vmem:[%s277 + $0x60] sm:$0xff] %v302
                %v304 = vld [vmem:[%s276 + $0x68] sm:$0xff]
                %305 = vst [vmem:[%s277 + $0x68] sm:$0xff] %v304
                %v306 = vld [vmem:[%s276 + $0x70] sm:$0xff]
                %307 = vst [vmem:[%s277 + $0x70] sm:$0xff] %v306
                %v308 = vld [vmem:[%s276 + $0x78] sm:$0xff]
                %309 = vst [vmem:[%s277 + $0x78] sm:$0xff] %v308
                %v310 = vld [vmem:[%s276 + $0x100] sm:$0xff]
                %311 = vst [vmem:[%s277 + $0x80] sm:$0xff] %v310
                %v312 = vld [vmem:[%s276 + $0x108] sm:$0xff]
                %313 = vst [vmem:[%s277 + $0x88] sm:$0xff] %v312
                %v314 = vld [vmem:[%s276 + $0x110] sm:$0xff]
                %315 = vst [vmem:[%s277 + $0x90] sm:$0xff] %v314
                %v316 = vld [vmem:[%s276 + $0x118] sm:$0xff]
                %317 = vst [vmem:[%s277 + $0x98] sm:$0xff] %v316
                %v318 = vld [vmem:[%s276 + $0x120] sm:$0xff]
                %319 = vst [vmem:[%s277 + $0xa0] sm:$0xff] %v318
                %v320 = vld [vmem:[%s276 + $0x128] sm:$0xff]
                %321 = vst [vmem:[%s277 + $0xa8] sm:$0xff] %v320
                %v322 = vld [vmem:[%s276 + $0x130] sm:$0xff]
                %323 = vst [vmem:[%s277 + $0xb0] sm:$0xff] %v322
                %v324 = vld [vmem:[%s276 + $0x138] sm:$0xff]
                %325 = vst [vmem:[%s277 + $0xb8] sm:$0xff] %v324
                %v326 = vld [vmem:[%s276 + $0x140] sm:$0xff]
                %327 = vst [vmem:[%s277 + $0xc0] sm:$0xff] %v326
                %v328 = vld [vmem:[%s276 + $0x148] sm:$0xff]
                %329 = vst [vmem:[%s277 + $0xc8] sm:$0xff] %v328
                %v330 = vld [vmem:[%s276 + $0x150] sm:$0xff]
                %331 = vst [vmem:[%s277 + $0xd0] sm:$0xff] %v330
                %v332 = vld [vmem:[%s276 + $0x158] sm:$0xff]
                %333 = vst [vmem:[%s277 + $0xd8] sm:$0xff] %v332
                %v334 = vld [vmem:[%s276 + $0x160] sm:$0xff]
                %335 = vst [vmem:[%s277 + $0xe0] sm:$0xff] %v334
                %v336 = vld [vmem:[%s276 + $0x168] sm:$0xff]
                %337 = vst [vmem:[%s277 + $0xe8] sm:$0xff] %v336
                %v338 = vld [vmem:[%s276 + $0x170] sm:$0xff]
                %339 = vst [vmem:[%s277 + $0xf0] sm:$0xff] %v338
                %v340 = vld [vmem:[%s276 + $0x178] sm:$0xff]
                %341 = vst [vmem:[%s277 + $0xf8] sm:$0xff] %v340
                %v342 = vld [vmem:[%s276 + $0x200] sm:$0xff]
                %343 = vst [vmem:[%s277 + $0x100] sm:$0xff] %v342
                %v344 = vld [vmem:[%s276 + $0x208] sm:$0xff]
                %345 = vst [vmem:[%s277 + $0x108] sm:$0xff] %v344
                %v346 = vld [vmem:[%s276 + $0x210] sm:$0xff]
                %347 = vst [vmem:[%s277 + $0x110] sm:$0xff] %v346
                %v348 = vld [vmem:[%s276 + $0x218] sm:$0xff]
                %349 = vst [vmem:[%s277 + $0x118] sm:$0xff] %v348
                %v350 = vld [vmem:[%s276 + $0x220] sm:$0xff]
                %351 = vst [vmem:[%s277 + $0x120] sm:$0xff] %v350
                %v352 = vld [vmem:[%s276 + $0x228] sm:$0xff]
                %353 = vst [vmem:[%s277 + $0x128] sm:$0xff] %v352
                %v354 = vld [vmem:[%s276 + $0x230] sm:$0xff]
                %355 = vst [vmem:[%s277 + $0x130] sm:$0xff] %v354
                %v356 = vld [vmem:[%s276 + $0x238] sm:$0xff]
                %357 = vst [vmem:[%s277 + $0x138] sm:$0xff] %v356
                %v358 = vld [vmem:[%s276 + $0x240] sm:$0xff]
                %359 = vst [vmem:[%s277 + $0x140] sm:$0xff] %v358
                %v360 = vld [vmem:[%s276 + $0x248] sm:$0xff]
                %361 = vst [vmem:[%s277 + $0x148] sm:$0xff] %v360
                %v362 = vld [vmem:[%s276 + $0x250] sm:$0xff]
                %363 = vst [vmem:[%s277 + $0x150] sm:$0xff] %v362
                %v364 = vld [vmem:[%s276 + $0x258] sm:$0xff]
                %365 = vst [vmem:[%s277 + $0x158] sm:$0xff] %v364
                %v366 = vld [vmem:[%s276 + $0x260] sm:$0xff]
                %367 = vst [vmem:[%s277 + $0x160] sm:$0xff] %v366
                %v368 = vld [vmem:[%s276 + $0x268] sm:$0xff]
                %369 = vst [vmem:[%s277 + $0x168] sm:$0xff] %v368
                %v370 = vld [vmem:[%s276 + $0x270] sm:$0xff]
                %371 = vst [vmem:[%s277 + $0x170] sm:$0xff] %v370
                %v372 = vld [vmem:[%s276 + $0x278] sm:$0xff]
                %373 = vst [vmem:[%s277 + $0x178] sm:$0xff] %v372
                %v374 = vld [vmem:[%s276 + $0x300] sm:$0xff]
                %375 = vst [vmem:[%s277 + $0x180] sm:$0xff] %v374
                %v376 = vld [vmem:[%s276 + $0x308] sm:$0xff]
                %377 = vst [vmem:[%s277 + $0x188] sm:$0xff] %v376
                %v378 = vld [vmem:[%s276 + $0x310] sm:$0xff]
                %379 = vst [vmem:[%s277 + $0x190] sm:$0xff] %v378
                %v380 = vld [vmem:[%s276 + $0x318] sm:$0xff]
                %381 = vst [vmem:[%s277 + $0x198] sm:$0xff] %v380
                %v382 = vld [vmem:[%s276 + $0x320] sm:$0xff]
                %383 = vst [vmem:[%s277 + $0x1a0] sm:$0xff] %v382
                %v384 = vld [vmem:[%s276 + $0x328] sm:$0xff]
                %385 = vst [vmem:[%s277 + $0x1a8] sm:$0xff] %v384
                %v386 = vld [vmem:[%s276 + $0x330] sm:$0xff]
                %387 = vst [vmem:[%s277 + $0x1b0] sm:$0xff] %v386
                %v388 = vld [vmem:[%s276 + $0x338] sm:$0xff]
                %389 = vst [vmem:[%s277 + $0x1b8] sm:$0xff] %v388
                %v390 = vld [vmem:[%s276 + $0x340] sm:$0xff]
                %391 = vst [vmem:[%s277 + $0x1c0] sm:$0xff] %v390
                %v392 = vld [vmem:[%s276 + $0x348] sm:$0xff]
                %393 = vst [vmem:[%s277 + $0x1c8] sm:$0xff] %v392
                %v394 = vld [vmem:[%s276 + $0x350] sm:$0xff]
                %395 = vst [vmem:[%s277 + $0x1d0] sm:$0xff] %v394
                %v396 = vld [vmem:[%s276 + $0x358] sm:$0xff]
                %397 = vst [vmem:[%s277 + $0x1d8] sm:$0xff] %v396
                %v398 = vld [vmem:[%s276 + $0x360] sm:$0xff]
                %399 = vst [vmem:[%s277 + $0x1e0] sm:$0xff] %v398
                %v400 = vld [vmem:[%s276 + $0x368] sm:$0xff]
                %401 = vst [vmem:[%s277 + $0x1e8] sm:$0xff] %v400
                %v402 = vld [vmem:[%s276 + $0x370] sm:$0xff]
                %403 = vst [vmem:[%s277 + $0x1f0] sm:$0xff] %v402
                %v404 = vld [vmem:[%s276 + $0x378] sm:$0xff]
                %405 = vst [vmem:[%s277 + $0x1f8] sm:$0xff] %v404
                %v406 = vld [vmem:[%s276 + $0x400] sm:$0xff]
                %407 = vst [vmem:[%s277 + $0x200] sm:$0xff] %v406
                %v408 = vld [vmem:[%s276 + $0x408] sm:$0xff]
                %409 = vst [vmem:[%s277 + $0x208] sm:$0xff] %v408
                %v410 = vld [vmem:[%s276 + $0x410] sm:$0xff]
                %411 = vst [vmem:[%s277 + $0x210] sm:$0xff] %v410
                %v412 = vld [vmem:[%s276 + $0x418] sm:$0xff]
                %413 = vst [vmem:[%s277 + $0x218] sm:$0xff] %v412
                %v414 = vld [vmem:[%s276 + $0x420] sm:$0xff]
                %415 = vst [vmem:[%s277 + $0x220] sm:$0xff] %v414
                %v416 = vld [vmem:[%s276 + $0x428] sm:$0xff]
                %417 = vst [vmem:[%s277 + $0x228] sm:$0xff] %v416
                %v418 = vld [vmem:[%s276 + $0x430] sm:$0xff]
                %419 = vst [vmem:[%s277 + $0x230] sm:$0xff] %v418
                %v420 = vld [vmem:[%s276 + $0x438] sm:$0xff]
                %421 = vst [vmem:[%s277 + $0x238] sm:$0xff] %v420
                %v422 = vld [vmem:[%s276 + $0x440] sm:$0xff]
                %423 = vst [vmem:[%s277 + $0x240] sm:$0xff] %v422
                %v424 = vld [vmem:[%s276 + $0x448] sm:$0xff]
                %425 = vst [vmem:[%s277 + $0x248] sm:$0xff] %v424
                %v426 = vld [vmem:[%s276 + $0x450] sm:$0xff]
                %427 = vst [vmem:[%s277 + $0x250] sm:$0xff] %v426
                %v428 = vld [vmem:[%s276 + $0x458] sm:$0xff]
                %429 = vst [vmem:[%s277 + $0x258] sm:$0xff] %v428
                %v430 = vld [vmem:[%s276 + $0x460] sm:$0xff]
                %431 = vst [vmem:[%s277 + $0x260] sm:$0xff] %v430
                %v432 = vld [vmem:[%s276 + $0x468] sm:$0xff]
                %433 = vst [vmem:[%s277 + $0x268] sm:$0xff] %v432
                %v434 = vld [vmem:[%s276 + $0x470] sm:$0xff]
                %435 = vst [vmem:[%s277 + $0x270] sm:$0xff] %v434
                %v436 = vld [vmem:[%s276 + $0x478] sm:$0xff]
                %437 = vst [vmem:[%s277 + $0x278] sm:$0xff] %v436
              $region61: #{recognition_forward.1} parent=55 // loop_footer
                %s275 = sadd.s32 1, %s271
              $region62: #{recognition_forward.1} parent=55 // loop_footer_branch
                %270 = sbr.rel target = $region58
              $region63: #{recognition_forward.1} parent=55 // loop_exit
                _
            $region56: #{recognition_forward.1} parent=51 // pred_fallthru
              _
            // Predicated region
            $region64: #{recognition_forward.1} parent=51 // pred_check
              _
            $region65: #{recognition_forward.1} parent=51 // pred_check_branch
              %439 = sbr.rel target = $region67
            $region66: #{recognition_forward.1} parent=51 // pred_region
              _
            $region67: #{recognition_forward.1} parent=51 // pred_fallthru
              _
          $region52: #{recognition_forward.1} parent=47 // pred_fallthru
            _
          %440 = vnop
        $region48: #{recognition_forward.1} parent=43 // pred_fallthru
          _
      $region44: #{recognition_forward.1} parent=5 // pred_fallthru
        _
      %p441 = scmp.le.s32.totalorder 1, %s17
      %p442 = scmp.lt.s32.totalorder %s17, 3
      %p443 = pnand %p441, %p442
      %p444 = pneg %p443
      // Predicated region
      $region68: #{recognition_forward.1} parent=5 // pred_check
        _
      $region69: #{recognition_forward.1} parent=5 // pred_check_branch
        %446 = sbr.rel (%p443) target = $region71
      $region70: #{recognition_forward.1} parent=5 // pred_region
        %s447 = ssub.s32 %s17, 1
        %s448 = sand.u32 %s30, 1
        %s449 = sand.u32 %s30, 1
        %s450 = smul.addr %s449, 640
        %s451 = scalar_lea.vmem [#allocation2], %s450
        // Predicated region
        $region72: #{recognition_forward.1} parent=70 // pred_check
          %p452 = pneg %p43
        $region73: #{recognition_forward.1} parent=70 // pred_check_branch
          %454 = sbr.rel (%p452) target = $region75
        $region74: #{recognition_forward.1} parent=70 // pred_region
          _
        $region75: #{recognition_forward.1} parent=70 // pred_fallthru
          _
        %s455 = sand.u32 %s30, 1
        %s456 = sand.u32 %s30, 1
        %s457 = smul.addr %s456, 640
        %s458 = scalar_lea.vmem [#allocation2], %s457
        %p459 = pneg %p43
        %p460 = pneg %p40
        %p461 = pneg %p64
        %p462 = pneg %p61
        %p463 = pneg %p85
        %p464 = pneg %p82
        %p465 = pneg %p106
        %p466 = pneg %p103
        %p467 = pneg %p127
        %p468 = pneg %p124
        %p469 = pneg %p148
        %p470 = pneg %p145
        %p471 = pneg %p169
        %p472 = pneg %p166
        %p473 = pneg %p190
        %p474 = pneg %p187
        %p475 = pneg %p216
        %p476 = pneg %p213
        %s477 = sand.u32 %s203, 1
        %s478 = scalar_lea.sflag [#allocation4], %s477
        %s479 = sand.u32 %s203, 1
        %s480 = smul.addr %s479, 8
        %s481 = scalar_lea.vmem [#allocation3], %s480
        %s482 = smul.u32 16, %s22
        %v483 = vld [vmem:[%s1] sm:$0xff]
        %v484 = vld [vmem:[%s1 + $0x8] sm:$0xff]
        %v485 = vld [vmem:[%s1 + $0x10] sm:$0xff]
        %v486 = vld [vmem:[%s1 + $0x18] sm:$0xff]
        %v487 = vld [vmem:[%s451] sm:$0xff]
        %v488 = vld [vmem:[%s451 + $0x8] sm:$0xff]
        %v489 = vld [vmem:[%s451 + $0x10] sm:$0xff]
        %v490 = vld [vmem:[%s451 + $0x18] sm:$0xff]
        %v491 = vld [vmem:[%s451 + $0x20] sm:$0xff]
        %v492 = vld [vmem:[%s451 + $0x28] sm:$0xff]
        %v493 = vld [vmem:[%s451 + $0x30] sm:$0xff]
        %v494 = vld [vmem:[%s451 + $0x38] sm:$0xff]
        %v495 = vld [vmem:[%s451 + $0x40] sm:$0xff]
        %v496 = vld [vmem:[%s451 + $0x48] sm:$0xff]
        %v497 = vld [vmem:[%s451 + $0x50] sm:$0xff]
        %v498 = vld [vmem:[%s451 + $0x58] sm:$0xff]
        %v499 = vld [vmem:[%s451 + $0x60] sm:$0xff]
        %v500 = vld [vmem:[%s451 + $0x68] sm:$0xff]
        %v501 = vld [vmem:[%s451 + $0x70] sm:$0xff]
        %v502 = vld [vmem:[%s451 + $0x78] sm:$0xff]
        %v503 = vld [vmem:[%s451 + $0x80] sm:$0xff]
        %v504 = vld [vmem:[%s451 + $0x88] sm:$0xff]
        %v505 = vld [vmem:[%s451 + $0x90] sm:$0xff]
        %v506 = vld [vmem:[%s451 + $0x98] sm:$0xff]
        %v507 = vld [vmem:[%s451 + $0xa0] sm:$0xff]
        %v508 = vld [vmem:[%s451 + $0xa8] sm:$0xff]
        %v509 = vld [vmem:[%s451 + $0xb0] sm:$0xff]
        %v510 = vld [vmem:[%s451 + $0xb8] sm:$0xff]
        %v511 = vld [vmem:[%s451 + $0xc0] sm:$0xff]
        %v512 = vld [vmem:[%s451 + $0xc8] sm:$0xff]
        %v513 = vld [vmem:[%s451 + $0xd0] sm:$0xff]
        %v514 = vld [vmem:[%s451 + $0xd8] sm:$0xff]
        %v515 = vld [vmem:[%s451 + $0xe0] sm:$0xff]
        %v516 = vld [vmem:[%s451 + $0xe8] sm:$0xff]
        %v517 = vld [vmem:[%s451 + $0xf0] sm:$0xff]
        %v518 = vld [vmem:[%s451 + $0xf8] sm:$0xff]
        %v519 = vld [vmem:[%s451 + $0x100] sm:$0xff]
        %v520 = vld [vmem:[%s451 + $0x108] sm:$0xff]
        %v521 = vld [vmem:[%s451 + $0x110] sm:$0xff]
        %v522 = vld [vmem:[%s451 + $0x118] sm:$0xff]
        %v523 = vld [vmem:[%s451 + $0x120] sm:$0xff]
        %v524 = vld [vmem:[%s451 + $0x128] sm:$0xff]
        %v525 = vld [vmem:[%s451 + $0x130] sm:$0xff]
        %v526 = vld [vmem:[%s451 + $0x138] sm:$0xff]
        %v527 = vld [vmem:[%s451 + $0x140] sm:$0xff]
        %v528 = vld [vmem:[%s451 + $0x148] sm:$0xff]
        %v529 = vld [vmem:[%s451 + $0x150] sm:$0xff]
        %v530 = vld [vmem:[%s451 + $0x158] sm:$0xff]
        %v531 = vld [vmem:[%s451 + $0x160] sm:$0xff]
        %v532 = vld [vmem:[%s451 + $0x168] sm:$0xff]
        %v533 = vld [vmem:[%s451 + $0x170] sm:$0xff]
        %v534 = vld [vmem:[%s451 + $0x178] sm:$0xff]
        %v535 = vld [vmem:[%s451 + $0x180] sm:$0xff]
        %v536 = vld [vmem:[%s451 + $0x188] sm:$0xff]
        %v537 = vld [vmem:[%s451 + $0x190] sm:$0xff]
        %v538 = vld [vmem:[%s451 + $0x198] sm:$0xff]
        %v539 = vld [vmem:[%s451 + $0x1a0] sm:$0xff]
        %v540 = vld [vmem:[%s451 + $0x1a8] sm:$0xff]
        %v541 = vld [vmem:[%s451 + $0x1b0] sm:$0xff]
        %v542 = vld [vmem:[%s451 + $0x1b8] sm:$0xff]
        %v543 = vld [vmem:[%s451 + $0x1c0] sm:$0xff]
        %v544 = vld [vmem:[%s451 + $0x1c8] sm:$0xff]
        %v545 = vld [vmem:[%s451 + $0x1d0] sm:$0xff]
        %v546 = vld [vmem:[%s451 + $0x1d8] sm:$0xff]
        %v547 = vld [vmem:[%s451 + $0x1e0] sm:$0xff]
        %v548 = vld [vmem:[%s451 + $0x1e8] sm:$0xff]
        %v549 = vld [vmem:[%s451 + $0x1f0] sm:$0xff]
        %v550 = vld [vmem:[%s451 + $0x1f8] sm:$0xff]
        %v551 = vld [vmem:[%s451 + $0x200] sm:$0xf]
        %v552 = vld [vmem:[%s451 + $0x208] sm:$0xf]
        %v553 = vld [vmem:[%s451 + $0x210] sm:$0xf]
        %v554 = vld [vmem:[%s451 + $0x218] sm:$0xf]
        %v555 = vld [vmem:[%s451 + $0x220] sm:$0xf]
        %v556 = vld [vmem:[%s451 + $0x228] sm:$0xf]
        %v557 = vld [vmem:[%s451 + $0x230] sm:$0xf]
        %v558 = vld [vmem:[%s451 + $0x238] sm:$0xf]
        %v559 = vld [vmem:[%s451 + $0x240] sm:$0xf]
        %v560 = vld [vmem:[%s451 + $0x248] sm:$0xf]
        %v561 = vld [vmem:[%s451 + $0x250] sm:$0xf]
        %v562 = vld [vmem:[%s451 + $0x258] sm:$0xf]
        %v563 = vld [vmem:[%s451 + $0x260] sm:$0xf]
        %v564 = vld [vmem:[%s451 + $0x268] sm:$0xf]
        %v565 = vld [vmem:[%s451 + $0x270] sm:$0xf]
        %v566 = vld [vmem:[%s451 + $0x278] sm:$0xf]
        %v567 = vld [vmem:[%s2] sm:$0xff]
        %v568 = vld [vmem:[%s2 + $0x8] sm:$0xff]
        %v569 = vld [vmem:[%s2 + $0x10] sm:$0xff]
        %v570 = vld [vmem:[%s2 + $0x18] sm:$0xff]
        %572 = vset.pattern.permute.xlu0 0
        %573 = vperm.xlu0 %572, %v567
        %v574 = vpop.permute.xlu0 %573
        %577 = vset.pattern.permute.xlu0 0
        %578 = vperm.xlu0 %577, %v568
        %v579 = vpop.permute.xlu0 %578
        %582 = vset.pattern.permute.xlu0 0
        %583 = vperm.xlu0 %582, %v569
        %v584 = vpop.permute.xlu0 %583
        %587 = vset.pattern.permute.xlu0 0
        %588 = vperm.xlu0 %587, %v570
        %v589 = vpop.permute.xlu0 %588
        %vm591 = vcmask 293888
        %v593 = vsel %vm591, %v483, 0
        %v596 = vsel %vm591, %v484, 0
        %v599 = vsel %vm591, %v485, 0
        %v602 = vsel %vm591, %v486, 0
        %vm604 = vcmask 1043456
        %v606 = vsel %vm604, %v551, 0
        %v609 = vsel %vm604, %v552, 0
        %v612 = vsel %vm604, %v553, 0
        %v615 = vsel %vm604, %v554, 0
        %v618 = vsel %vm604, %v555, 0
        %v621 = vsel %vm604, %v556, 0
        %v624 = vsel %vm604, %v557, 0
        %v627 = vsel %vm604, %v558, 0
        %v630 = vsel %vm604, %v559, 0
        %v633 = vsel %vm604, %v560, 0
        %v636 = vsel %vm604, %v561, 0
        %v639 = vsel %vm604, %v562, 0
        %v642 = vsel %vm604, %v563, 0
        %v645 = vsel %vm604, %v564, 0
        %v648 = vsel %vm604, %v565, 0
        %v651 = vsel %vm604, %v566, 0
        %653 = vmatprep.subr.mxu0 0.0
        %654 = vmatpush1.msra.mxu0 0.0
        %655 = vmatprep.subr.mxu0 0.0
        %656 = vmatpush1.msra.mxu0 0.0
        %657 = vmatprep.subr.mxu0 0.0
        %658 = vmatpush1.msra.mxu0 0.0
        %659 = vmatprep.subr.mxu0 0.0
        %660 = vmatpush1.msra.mxu0 0.0
        %661 = vmatprep.subr.mxu0 0.0
        %662 = vmatpush1.msra.mxu0 0.0
        %663 = vmatprep.subr.mxu0 0.0
        %664 = vmatpush1.msra.mxu0 0.0
        %665 = vmatprep.subr.mxu0 0.0
        %666 = vmatpush1.msra.mxu0 0.0
        %667 = vmatprep.subr.mxu0 0.0
        %668 = vmatpush1.msra.mxu0 0.0
        %669 = vmatprep.subr.mxu0 0.0
        %670 = vmatpush1.msra.mxu0 0.0
        %671 = vmatprep.subr.mxu0 0.0
        %672 = vmatpush1.msra.mxu0 0.0
        %673 = vmatprep.subr.mxu0 0.0
        %674 = vmatpush1.msra.mxu0 0.0
        %675 = vmatprep.subr.mxu0 %v609
        %676 = vmatpush1.msra.mxu0 %v606
        %677 = vmatprep.subr.mxu0 %v536
        %678 = vmatpush1.msra.mxu0 %v535
        %679 = vmatprep.subr.mxu0 %v520
        %680 = vmatpush1.msra.mxu0 %v519
        %681 = vmatprep.subr.mxu0 %v504
        %682 = vmatpush1.msra.mxu0 %v503
        %683 = vmatprep.subr.mxu0 %v488
        %684 = vmatpush1.msra.mxu0 %v487
        %685 = vmatprep.subr.mxu0 0.0
        %686 = vmatpush2.msra.mxu0 0.0
        %687 = vmatprep.subr.mxu0 0.0
        %688 = vmatpush2.msra.mxu0 0.0
        %689 = vmatprep.subr.mxu0 0.0
        %690 = vmatpush2.msra.mxu0 0.0
        %691 = vmatprep.subr.mxu0 0.0
        %692 = vmatpush2.msra.mxu0 0.0
        %693 = vmatprep.subr.mxu0 0.0
        %694 = vmatpush2.msra.mxu0 0.0
        %695 = vmatprep.subr.mxu0 0.0
        %696 = vmatpush2.msra.mxu0 0.0
        %697 = vmatprep.subr.mxu0 0.0
        %698 = vmatpush2.msra.mxu0 0.0
        %699 = vmatprep.subr.mxu0 0.0
        %700 = vmatpush2.msra.mxu0 0.0
        %701 = vmatprep.subr.mxu0 0.0
        %702 = vmatpush2.msra.mxu0 0.0
        %703 = vmatprep.subr.mxu0 0.0
        %704 = vmatpush2.msra.mxu0 0.0
        %705 = vmatprep.subr.mxu0 0.0
        %706 = vmatpush2.msra.mxu0 0.0
        %707 = vmatprep.subr.mxu0 0.0
        %708 = vmatpush2.msra.mxu0 0.0
        %709 = vmatprep.subr.mxu0 0.0
        %710 = vmatpush2.msra.mxu0 0.0
        %711 = vmatprep.subr.mxu0 0.0
        %712 = vmatpush2.msra.mxu0 0.0
        %713 = vmatprep.subr.mxu0 0.0
        %714 = vmatpush2.msra.mxu0 0.0
        %715 = vmatprep.subr.mxu0 0.0
        %716 = vmatpush2.msra.mxu0 0.0
        %717 = vmatprep.mubr.f32.mxu0 0.0
        %718 = vmatmul.mubr.f32.gmra.mxu0 %v593
        %v719 = vpop.f32.mrf.mxu0
        %v720 = vadd.f32 %v574, %v719
        %v721 = vpop.f32.mrf.mxu0
        %v722 = vadd.f32 %v574, %v721
        %723 = vmatprep.mubr.f32.mxu0 0.0
        %724 = vmatmul.mubr.f32.gmra.mxu0 %v596
        %v725 = vpop.f32.mrf.mxu0
        %v726 = vadd.f32 %v579, %v725
        %v727 = vpop.f32.mrf.mxu0
        %v728 = vadd.f32 %v579, %v727
        %729 = vmatprep.mubr.f32.mxu0 0.0
        %730 = vmatmul.mubr.f32.gmra.mxu0 %v599
        %v731 = vpop.f32.mrf.mxu0
        %v732 = vadd.f32 %v584, %v731
        %v733 = vpop.f32.mrf.mxu0
        %v734 = vadd.f32 %v584, %v733
        %735 = vmatprep.mubr.f32.mxu0 0.0
        %736 = vmatmul.mubr.f32.gmra.mxu0 %v602
        %v737 = vpop.f32.mrf.mxu0
        %v738 = vadd.f32 %v589, %v737
        %v739 = vpop.f32.mrf.mxu0
        %v740 = vadd.f32 %v589, %v739
        %741 = vdwg.mxu0
        %742 = vmatprep.subr.mxu0 0.0
        %743 = vmatpush1.msra.mxu0 0.0
        %744 = vmatprep.subr.mxu0 0.0
        %745 = vmatpush1.msra.mxu0 0.0
        %746 = vmatprep.subr.mxu0 0.0
        %747 = vmatpush1.msra.mxu0 0.0
        %748 = vmatprep.subr.mxu0 0.0
        %749 = vmatpush1.msra.mxu0 0.0
        %750 = vmatprep.subr.mxu0 0.0
        %751 = vmatpush1.msra.mxu0 0.0
        %752 = vmatprep.subr.mxu0 0.0
        %753 = vmatpush1.msra.mxu0 0.0
        %754 = vmatprep.subr.mxu0 0.0
        %755 = vmatpush1.msra.mxu0 0.0
        %756 = vmatprep.subr.mxu0 0.0
        %757 = vmatpush1.msra.mxu0 0.0
        %758 = vmatprep.subr.mxu0 0.0
        %759 = vmatpush1.msra.mxu0 0.0
        %760 = vmatprep.subr.mxu0 0.0
        %761 = vmatpush1.msra.mxu0 0.0
        %762 = vmatprep.subr.mxu0 0.0
        %763 = vmatpush1.msra.mxu0 0.0
        %764 = vmatprep.subr.mxu0 %v615
        %765 = vmatpush1.msra.mxu0 %v612
        %766 = vmatprep.subr.mxu0 %v538
        %767 = vmatpush1.msra.mxu0 %v537
        %768 = vmatprep.subr.mxu0 %v522
        %769 = vmatpush1.msra.mxu0 %v521
        %770 = vmatprep.subr.mxu0 %v506
        %771 = vmatpush1.msra.mxu0 %v505
        %772 = vmatprep.subr.mxu0 %v490
        %773 = vmatpush1.msra.mxu0 %v489
        %774 = vmatprep.subr.mxu0 0.0
        %775 = vmatpush2.msra.mxu0 0.0
        %776 = vmatprep.subr.mxu0 0.0
        %777 = vmatpush2.msra.mxu0 0.0
        %778 = vmatprep.subr.mxu0 0.0
        %779 = vmatpush2.msra.mxu0 0.0
        %780 = vmatprep.subr.mxu0 0.0
        %781 = vmatpush2.msra.mxu0 0.0
        %782 = vmatprep.subr.mxu0 0.0
        %783 = vmatpush2.msra.mxu0 0.0
        %784 = vmatprep.subr.mxu0 0.0
        %785 = vmatpush2.msra.mxu0 0.0
        %786 = vmatprep.subr.mxu0 0.0
        %787 = vmatpush2.msra.mxu0 0.0
        %788 = vmatprep.subr.mxu0 0.0
        %789 = vmatpush2.msra.mxu0 0.0
        %790 = vmatprep.subr.mxu0 0.0
        %791 = vmatpush2.msra.mxu0 0.0
        %792 = vmatprep.subr.mxu0 0.0
        %793 = vmatpush2.msra.mxu0 0.0
        %794 = vmatprep.subr.mxu0 0.0
        %795 = vmatpush2.msra.mxu0 0.0
        %796 = vmatprep.subr.mxu0 0.0
        %797 = vmatpush2.msra.mxu0 0.0
        %798 = vmatprep.subr.mxu0 0.0
        %799 = vmatpush2.msra.mxu0 0.0
        %800 = vmatprep.subr.mxu0 0.0
        %801 = vmatpush2.msra.mxu0 0.0
        %802 = vmatprep.subr.mxu0 0.0
        %803 = vmatpush2.msra.mxu0 0.0
        %804 = vmatprep.subr.mxu0 0.0
        %805 = vmatpush2.msra.mxu0 0.0
        %806 = vmatprep.mubr.f32.mxu0 0.0
        %807 = vmatmul.mubr.f32.gmra.mxu0 %v593
        %v808 = vpop.f32.mrf.mxu0
        %v809 = vadd.f32 %v574, %v808
        %v810 = vpop.f32.mrf.mxu0
        %v811 = vadd.f32 %v574, %v810
        %812 = vmatprep.mubr.f32.mxu0 0.0
        %813 = vmatmul.mubr.f32.gmra.mxu0 %v596
        %v814 = vpop.f32.mrf.mxu0
        %v815 = vadd.f32 %v579, %v814
        %v816 = vpop.f32.mrf.mxu0
        %v817 = vadd.f32 %v579, %v816
        %818 = vmatprep.mubr.f32.mxu0 0.0
        %819 = vmatmul.mubr.f32.gmra.mxu0 %v599
        %v820 = vpop.f32.mrf.mxu0
        %v821 = vadd.f32 %v584, %v820
        %v822 = vpop.f32.mrf.mxu0
        %v823 = vadd.f32 %v584, %v822
        %824 = vmatprep.mubr.f32.mxu0 0.0
        %825 = vmatmul.mubr.f32.gmra.mxu0 %v602
        %v826 = vpop.f32.mrf.mxu0
        %v827 = vadd.f32 %v589, %v826
        %v828 = vpop.f32.mrf.mxu0
        %v829 = vadd.f32 %v589, %v828
        %830 = vdwg.mxu0
        %831 = vmatprep.subr.mxu0 0.0
        %832 = vmatpush1.msra.mxu0 0.0
        %833 = vmatprep.subr.mxu0 0.0
        %834 = vmatpush1.msra.mxu0 0.0
        %835 = vmatprep.subr.mxu0 0.0
        %836 = vmatpush1.msra.mxu0 0.0
        %837 = vmatprep.subr.mxu0 0.0
        %838 = vmatpush1.msra.mxu0 0.0
        %839 = vmatprep.subr.mxu0 0.0
        %840 = vmatpush1.msra.mxu0 0.0
        %841 = vmatprep.subr.mxu0 0.0
        %842 = vmatpush1.msra.mxu0 0.0
        %843 = vmatprep.subr.mxu0 0.0
        %844 = vmatpush1.msra.mxu0 0.0
        %845 = vmatprep.subr.mxu0 0.0
        %846 = vmatpush1.msra.mxu0 0.0
        %847 = vmatprep.subr.mxu0 0.0
        %848 = vmatpush1.msra.mxu0 0.0
        %849 = vmatprep.subr.mxu0 0.0
        %850 = vmatpush1.msra.mxu0 0.0
        %851 = vmatprep.subr.mxu0 0.0
        %852 = vmatpush1.msra.mxu0 0.0
        %853 = vmatprep.subr.mxu0 %v621
        %854 = vmatpush1.msra.mxu0 %v618
        %855 = vmatprep.subr.mxu0 %v540
        %856 = vmatpush1.msra.mxu0 %v539
        %857 = vmatprep.subr.mxu0 %v524
        %858 = vmatpush1.msra.mxu0 %v523
        %859 = vmatprep.subr.mxu0 %v508
        %860 = vmatpush1.msra.mxu0 %v507
        %861 = vmatprep.subr.mxu0 %v492
        %862 = vmatpush1.msra.mxu0 %v491
        %863 = vmatprep.subr.mxu0 0.0
        %864 = vmatpush2.msra.mxu0 0.0
        %865 = vmatprep.subr.mxu0 0.0
        %866 = vmatpush2.msra.mxu0 0.0
        %867 = vmatprep.subr.mxu0 0.0
        %868 = vmatpush2.msra.mxu0 0.0
        %869 = vmatprep.subr.mxu0 0.0
        %870 = vmatpush2.msra.mxu0 0.0
        %871 = vmatprep.subr.mxu0 0.0
        %872 = vmatpush2.msra.mxu0 0.0
        %873 = vmatprep.subr.mxu0 0.0
        %874 = vmatpush2.msra.mxu0 0.0
        %875 = vmatprep.subr.mxu0 0.0
        %876 = vmatpush2.msra.mxu0 0.0
        %877 = vmatprep.subr.mxu0 0.0
        %878 = vmatpush2.msra.mxu0 0.0
        %879 = vmatprep.subr.mxu0 0.0
        %880 = vmatpush2.msra.mxu0 0.0
        %881 = vmatprep.subr.mxu0 0.0
        %882 = vmatpush2.msra.mxu0 0.0
        %883 = vmatprep.subr.mxu0 0.0
        %884 = vmatpush2.msra.mxu0 0.0
        %885 = vmatprep.subr.mxu0 0.0
        %886 = vmatpush2.msra.mxu0 0.0
        %887 = vmatprep.subr.mxu0 0.0
        %888 = vmatpush2.msra.mxu0 0.0
        %889 = vmatprep.subr.mxu0 0.0
        %890 = vmatpush2.msra.mxu0 0.0
        %891 = vmatprep.subr.mxu0 0.0
        %892 = vmatpush2.msra.mxu0 0.0
        %893 = vmatprep.subr.mxu0 0.0
        %894 = vmatpush2.msra.mxu0 0.0
        %895 = vmatprep.mubr.f32.mxu0 0.0
        %896 = vmatmul.mubr.f32.gmra.mxu0 %v593
        %v897 = vpop.f32.mrf.mxu0
        %v898 = vadd.f32 %v574, %v897
        %v899 = vpop.f32.mrf.mxu0
        %v900 = vadd.f32 %v574, %v899
        %901 = vmatprep.mubr.f32.mxu0 0.0
        %902 = vmatmul.mubr.f32.gmra.mxu0 %v596
        %v903 = vpop.f32.mrf.mxu0
        %v904 = vadd.f32 %v579, %v903
        %v905 = vpop.f32.mrf.mxu0
        %v906 = vadd.f32 %v579, %v905
        %907 = vmatprep.mubr.f32.mxu0 0.0
        %908 = vmatmul.mubr.f32.gmra.mxu0 %v599
        %v909 = vpop.f32.mrf.mxu0
        %v910 = vadd.f32 %v584, %v909
        %v911 = vpop.f32.mrf.mxu0
        %v912 = vadd.f32 %v584, %v911
        %913 = vmatprep.mubr.f32.mxu0 0.0
        %914 = vmatmul.mubr.f32.gmra.mxu0 %v602
        %v915 = vpop.f32.mrf.mxu0
        %v916 = vadd.f32 %v589, %v915
        %v917 = vpop.f32.mrf.mxu0
        %v918 = vadd.f32 %v589, %v917
        %919 = vdwg.mxu0
        %920 = vmatprep.subr.mxu0 0.0
        %921 = vmatpush1.msra.mxu0 0.0
        %922 = vmatprep.subr.mxu0 0.0
        %923 = vmatpush1.msra.mxu0 0.0
        %924 = vmatprep.subr.mxu0 0.0
        %925 = vmatpush1.msra.mxu0 0.0
        %926 = vmatprep.subr.mxu0 0.0
        %927 = vmatpush1.msra.mxu0 0.0
        %928 = vmatprep.subr.mxu0 0.0
        %929 = vmatpush1.msra.mxu0 0.0
        %930 = vmatprep.subr.mxu0 0.0
        %931 = vmatpush1.msra.mxu0 0.0
        %932 = vmatprep.subr.mxu0 0.0
        %933 = vmatpush1.msra.mxu0 0.0
        %934 = vmatprep.subr.mxu0 0.0
        %935 = vmatpush1.msra.mxu0 0.0
        %936 = vmatprep.subr.mxu0 0.0
        %937 = vmatpush1.msra.mxu0 0.0
        %938 = vmatprep.subr.mxu0 0.0
        %939 = vmatpush1.msra.mxu0 0.0
        %940 = vmatprep.subr.mxu0 0.0
        %941 = vmatpush1.msra.mxu0 0.0
        %942 = vmatprep.subr.mxu0 %v627
        %943 = vmatpush1.msra.mxu0 %v624
        %944 = vmatprep.subr.mxu0 %v542
        %945 = vmatpush1.msra.mxu0 %v541
        %946 = vmatprep.subr.mxu0 %v526
        %947 = vmatpush1.msra.mxu0 %v525
        %948 = vmatprep.subr.mxu0 %v510
        %949 = vmatpush1.msra.mxu0 %v509
        %950 = vmatprep.subr.mxu0 %v494
        %951 = vmatpush1.msra.mxu0 %v493
        %952 = vmatprep.subr.mxu0 0.0
        %953 = vmatpush2.msra.mxu0 0.0
        %954 = vmatprep.subr.mxu0 0.0
        %955 = vmatpush2.msra.mxu0 0.0
        %956 = vmatprep.subr.mxu0 0.0
        %957 = vmatpush2.msra.mxu0 0.0
        %958 = vmatprep.subr.mxu0 0.0
        %959 = vmatpush2.msra.mxu0 0.0
        %960 = vmatprep.subr.mxu0 0.0
        %961 = vmatpush2.msra.mxu0 0.0
        %962 = vmatprep.subr.mxu0 0.0
        %963 = vmatpush2.msra.mxu0 0.0
        %964 = vmatprep.subr.mxu0 0.0
        %965 = vmatpush2.msra.mxu0 0.0
        %966 = vmatprep.subr.mxu0 0.0
        %967 = vmatpush2.msra.mxu0 0.0
        %968 = vmatprep.subr.mxu0 0.0
        %969 = vmatpush2.msra.mxu0 0.0
        %970 = vmatprep.subr.mxu0 0.0
        %971 = vmatpush2.msra.mxu0 0.0
        %972 = vmatprep.subr.mxu0 0.0
        %973 = vmatpush2.msra.mxu0 0.0
        %974 = vmatprep.subr.mxu0 0.0
        %975 = vmatpush2.msra.mxu0 0.0
        %976 = vmatprep.subr.mxu0 0.0
        %977 = vmatpush2.msra.mxu0 0.0
        %978 = vmatprep.subr.mxu0 0.0
        %979 = vmatpush2.msra.mxu0 0.0
        %980 = vmatprep.subr.mxu0 0.0
        %981 = vmatpush2.msra.mxu0 0.0
        %982 = vmatprep.subr.mxu0 0.0
        %983 = vmatpush2.msra.mxu0 0.0
        %984 = vmatprep.mubr.f32.mxu0 0.0
        %985 = vmatmul.mubr.f32.gmra.mxu0 %v593
        %v986 = vpop.f32.mrf.mxu0
        %v987 = vadd.f32 %v574, %v986
        %v988 = vpop.f32.mrf.mxu0
        %v989 = vadd.f32 %v574, %v988
        %990 = vmatprep.mubr.f32.mxu0 0.0
        %991 = vmatmul.mubr.f32.gmra.mxu0 %v596
        %v992 = vpop.f32.mrf.mxu0
        %v993 = vadd.f32 %v579, %v992
        %v994 = vpop.f32.mrf.mxu0
        %v995 = vadd.f32 %v579, %v994
        %996 = vmatprep.mubr.f32.mxu0 0.0
        %997 = vmatmul.mubr.f32.gmra.mxu0 %v599
        %v998 = vpop.f32.mrf.mxu0
        %v999 = vadd.f32 %v584, %v998
        %v1000 = vpop.f32.mrf.mxu0
        %v1001 = vadd.f32 %v584, %v1000
        %1002 = vmatprep.mubr.f32.mxu0 0.0
        %1003 = vmatmul.mubr.f32.gmra.mxu0 %v602
        %v1004 = vpop.f32.mrf.mxu0
        %v1005 = vadd.f32 %v589, %v1004
        %v1006 = vpop.f32.mrf.mxu0
        %v1007 = vadd.f32 %v589, %v1006
        %1008 = vdwg.mxu0
        %1009 = vmatprep.subr.mxu0 0.0
        %1010 = vmatpush1.msra.mxu0 0.0
        %1011 = vmatprep.subr.mxu0 0.0
        %1012 = vmatpush1.msra.mxu0 0.0
        %1013 = vmatprep.subr.mxu0 0.0
        %1014 = vmatpush1.msra.mxu0 0.0
        %1015 = vmatprep.subr.mxu0 0.0
        %1016 = vmatpush1.msra.mxu0 0.0
        %1017 = vmatprep.subr.mxu0 0.0
        %1018 = vmatpush1.msra.mxu0 0.0
        %1019 = vmatprep.subr.mxu0 0.0
        %1020 = vmatpush1.msra.mxu0 0.0
        %1021 = vmatprep.subr.mxu0 0.0
        %1022 = vmatpush1.msra.mxu0 0.0
        %1023 = vmatprep.subr.mxu0 0.0
        %1024 = vmatpush1.msra.mxu0 0.0
        %1025 = vmatprep.subr.mxu0 0.0
        %1026 = vmatpush1.msra.mxu0 0.0
        %1027 = vmatprep.subr.mxu0 0.0
        %1028 = vmatpush1.msra.mxu0 0.0
        %1029 = vmatprep.subr.mxu0 0.0
        %1030 = vmatpush1.msra.mxu0 0.0
        %1031 = vmatprep.subr.mxu0 %v633
        %1032 = vmatpush1.msra.mxu0 %v630
        %1033 = vmatprep.subr.mxu0 %v544
        %1034 = vmatpush1.msra.mxu0 %v543
        %1035 = vmatprep.subr.mxu0 %v528
        %1036 = vmatpush1.msra.mxu0 %v527
        %1037 = vmatprep.subr.mxu0 %v512
        %1038 = vmatpush1.msra.mxu0 %v511
        %1039 = vmatprep.subr.mxu0 %v496
        %1040 = vmatpush1.msra.mxu0 %v495
        %1041 = vmatprep.subr.mxu0 0.0
        %1042 = vmatpush2.msra.mxu0 0.0
        %1043 = vmatprep.subr.mxu0 0.0
        %1044 = vmatpush2.msra.mxu0 0.0
        %1045 = vmatprep.subr.mxu0 0.0
        %1046 = vmatpush2.msra.mxu0 0.0
        %1047 = vmatprep.subr.mxu0 0.0
        %1048 = vmatpush2.msra.mxu0 0.0
        %1049 = vmatprep.subr.mxu0 0.0
        %1050 = vmatpush2.msra.mxu0 0.0
        %1051 = vmatprep.subr.mxu0 0.0
        %1052 = vmatpush2.msra.mxu0 0.0
        %1053 = vmatprep.subr.mxu0 0.0
        %1054 = vmatpush2.msra.mxu0 0.0
        %1055 = vmatprep.subr.mxu0 0.0
        %1056 = vmatpush2.msra.mxu0 0.0
        %1057 = vmatprep.subr.mxu0 0.0
        %1058 = vmatpush2.msra.mxu0 0.0
        %1059 = vmatprep.subr.mxu0 0.0
        %1060 = vmatpush2.msra.mxu0 0.0
        %1061 = vmatprep.subr.mxu0 0.0
        %1062 = vmatpush2.msra.mxu0 0.0
        %1063 = vmatprep.subr.mxu0 0.0
        %1064 = vmatpush2.msra.mxu0 0.0
        %1065 = vmatprep.subr.mxu0 0.0
        %1066 = vmatpush2.msra.mxu0 0.0
        %1067 = vmatprep.subr.mxu0 0.0
        %1068 = vmatpush2.msra.mxu0 0.0
        %1069 = vmatprep.subr.mxu0 0.0
        %1070 = vmatpush2.msra.mxu0 0.0
        %1071 = vmatprep.subr.mxu0 0.0
        %1072 = vmatpush2.msra.mxu0 0.0
        %1073 = vmatprep.mubr.f32.mxu0 0.0
        %1074 = vmatmul.mubr.f32.gmra.mxu0 %v593
        %v1075 = vpop.f32.mrf.mxu0
        %v1076 = vadd.f32 %v574, %v1075
        %v1077 = vpop.f32.mrf.mxu0
        %v1078 = vadd.f32 %v574, %v1077
        %1079 = vmatprep.mubr.f32.mxu0 0.0
        %1080 = vmatmul.mubr.f32.gmra.mxu0 %v596
        %v1081 = vpop.f32.mrf.mxu0
        %v1082 = vadd.f32 %v579, %v1081
        %v1083 = vpop.f32.mrf.mxu0
        %v1084 = vadd.f32 %v579, %v1083
        %1085 = vmatprep.mubr.f32.mxu0 0.0
        %1086 = vmatmul.mubr.f32.gmra.mxu0 %v599
        %v1087 = vpop.f32.mrf.mxu0
        %v1088 = vadd.f32 %v584, %v1087
        %v1089 = vpop.f32.mrf.mxu0
        %v1090 = vadd.f32 %v584, %v1089
        %1091 = vmatprep.mubr.f32.mxu0 0.0
        %1092 = vmatmul.mubr.f32.gmra.mxu0 %v602
        %v1093 = vpop.f32.mrf.mxu0
        %v1094 = vadd.f32 %v589, %v1093
        %v1095 = vpop.f32.mrf.mxu0
        %v1096 = vadd.f32 %v589, %v1095
        %1097 = vdwg.mxu0
        %1098 = vmatprep.subr.mxu0 0.0
        %1099 = vmatpush1.msra.mxu0 0.0
        %1100 = vmatprep.subr.mxu0 0.0
        %1101 = vmatpush1.msra.mxu0 0.0
        %1102 = vmatprep.subr.mxu0 0.0
        %1103 = vmatpush1.msra.mxu0 0.0
        %1104 = vmatprep.subr.mxu0 0.0
        %1105 = vmatpush1.msra.mxu0 0.0
        %1106 = vmatprep.subr.mxu0 0.0
        %1107 = vmatpush1.msra.mxu0 0.0
        %1108 = vmatprep.subr.mxu0 0.0
        %1109 = vmatpush1.msra.mxu0 0.0
        %1110 = vmatprep.subr.mxu0 0.0
        %1111 = vmatpush1.msra.mxu0 0.0
        %1112 = vmatprep.subr.mxu0 0.0
        %1113 = vmatpush1.msra.mxu0 0.0
        %1114 = vmatprep.subr.mxu0 0.0
        %1115 = vmatpush1.msra.mxu0 0.0
        %1116 = vmatprep.subr.mxu0 0.0
        %1117 = vmatpush1.msra.mxu0 0.0
        %1118 = vmatprep.subr.mxu0 0.0
        %1119 = vmatpush1.msra.mxu0 0.0
        %1120 = vmatprep.subr.mxu0 %v639
        %1121 = vmatpush1.msra.mxu0 %v636
        %1122 = vmatprep.subr.mxu0 %v546
        %1123 = vmatpush1.msra.mxu0 %v545
        %1124 = vmatprep.subr.mxu0 %v530
        %1125 = vmatpush1.msra.mxu0 %v529
        %1126 = vmatprep.subr.mxu0 %v514
        %1127 = vmatpush1.msra.mxu0 %v513
        %1128 = vmatprep.subr.mxu0 %v498
        %1129 = vmatpush1.msra.mxu0 %v497
        %1130 = vmatprep.subr.mxu0 0.0
        %1131 = vmatpush2.msra.mxu0 0.0
        %1132 = vmatprep.subr.mxu0 0.0
        %1133 = vmatpush2.msra.mxu0 0.0
        %1134 = vmatprep.subr.mxu0 0.0
        %1135 = vmatpush2.msra.mxu0 0.0
        %1136 = vmatprep.subr.mxu0 0.0
        %1137 = vmatpush2.msra.mxu0 0.0
        %1138 = vmatprep.subr.mxu0 0.0
        %1139 = vmatpush2.msra.mxu0 0.0
        %1140 = vmatprep.subr.mxu0 0.0
        %1141 = vmatpush2.msra.mxu0 0.0
        %1142 = vmatprep.subr.mxu0 0.0
        %1143 = vmatpush2.msra.mxu0 0.0
        %1144 = vmatprep.subr.mxu0 0.0
        %1145 = vmatpush2.msra.mxu0 0.0
        %1146 = vmatprep.subr.mxu0 0.0
        %1147 = vmatpush2.msra.mxu0 0.0
        %1148 = vmatprep.subr.mxu0 0.0
        %1149 = vmatpush2.msra.mxu0 0.0
        %1150 = vmatprep.subr.mxu0 0.0
        %1151 = vmatpush2.msra.mxu0 0.0
        %1152 = vmatprep.subr.mxu0 0.0
        %1153 = vmatpush2.msra.mxu0 0.0
        %1154 = vmatprep.subr.mxu0 0.0
        %1155 = vmatpush2.msra.mxu0 0.0
        %1156 = vmatprep.subr.mxu0 0.0
        %1157 = vmatpush2.msra.mxu0 0.0
        %1158 = vmatprep.subr.mxu0 0.0
        %1159 = vmatpush2.msra.mxu0 0.0
        %1160 = vmatprep.subr.mxu0 0.0
        %1161 = vmatpush2.msra.mxu0 0.0
        %1162 = vmatprep.mubr.f32.mxu0 0.0
        %1163 = vmatmul.mubr.f32.gmra.mxu0 %v593
        %v1164 = vpop.f32.mrf.mxu0
        %v1165 = vadd.f32 %v574, %v1164
        %v1166 = vpop.f32.mrf.mxu0
        %v1167 = vadd.f32 %v574, %v1166
        %1168 = vmatprep.mubr.f32.mxu0 0.0
        %1169 = vmatmul.mubr.f32.gmra.mxu0 %v596
        %v1170 = vpop.f32.mrf.mxu0
        %v1171 = vadd.f32 %v579, %v1170
        %v1172 = vpop.f32.mrf.mxu0
        %v1173 = vadd.f32 %v579, %v1172
        %1174 = vmatprep.mubr.f32.mxu0 0.0
        %1175 = vmatmul.mubr.f32.gmra.mxu0 %v599
        %v1176 = vpop.f32.mrf.mxu0
        %v1177 = vadd.f32 %v584, %v1176
        %v1178 = vpop.f32.mrf.mxu0
        %v1179 = vadd.f32 %v584, %v1178
        %1180 = vmatprep.mubr.f32.mxu0 0.0
        %1181 = vmatmul.mubr.f32.gmra.mxu0 %v602
        %v1182 = vpop.f32.mrf.mxu0
        %v1183 = vadd.f32 %v589, %v1182
        %v1184 = vpop.f32.mrf.mxu0
        %v1185 = vadd.f32 %v589, %v1184
        %1186 = vdwg.mxu0
        %1187 = vmatprep.subr.mxu0 0.0
        %1188 = vmatpush1.msra.mxu0 0.0
        %1189 = vmatprep.subr.mxu0 0.0
        %1190 = vmatpush1.msra.mxu0 0.0
        %1191 = vmatprep.subr.mxu0 0.0
        %1192 = vmatpush1.msra.mxu0 0.0
        %1193 = vmatprep.subr.mxu0 0.0
        %1194 = vmatpush1.msra.mxu0 0.0
        %1195 = vmatprep.subr.mxu0 0.0
        %1196 = vmatpush1.msra.mxu0 0.0
        %1197 = vmatprep.subr.mxu0 0.0
        %1198 = vmatpush1.msra.mxu0 0.0
        %1199 = vmatprep.subr.mxu0 0.0
        %1200 = vmatpush1.msra.mxu0 0.0
        %1201 = vmatprep.subr.mxu0 0.0
        %1202 = vmatpush1.msra.mxu0 0.0
        %1203 = vmatprep.subr.mxu0 0.0
        %1204 = vmatpush1.msra.mxu0 0.0
        %1205 = vmatprep.subr.mxu0 0.0
        %1206 = vmatpush1.msra.mxu0 0.0
        %1207 = vmatprep.subr.mxu0 0.0
        %1208 = vmatpush1.msra.mxu0 0.0
        %1209 = vmatprep.subr.mxu0 %v645
        %1210 = vmatpush1.msra.mxu0 %v642
        %1211 = vmatprep.subr.mxu0 %v548
        %1212 = vmatpush1.msra.mxu0 %v547
        %1213 = vmatprep.subr.mxu0 %v532
        %1214 = vmatpush1.msra.mxu0 %v531
        %1215 = vmatprep.subr.mxu0 %v516
        %1216 = vmatpush1.msra.mxu0 %v515
        %1217 = vmatprep.subr.mxu0 %v500
        %1218 = vmatpush1.msra.mxu0 %v499
        %1219 = vmatprep.subr.mxu0 0.0
        %1220 = vmatpush2.msra.mxu0 0.0
        %1221 = vmatprep.subr.mxu0 0.0
        %1222 = vmatpush2.msra.mxu0 0.0
        %1223 = vmatprep.subr.mxu0 0.0
        %1224 = vmatpush2.msra.mxu0 0.0
        %1225 = vmatprep.subr.mxu0 0.0
        %1226 = vmatpush2.msra.mxu0 0.0
        %1227 = vmatprep.subr.mxu0 0.0
        %1228 = vmatpush2.msra.mxu0 0.0
        %1229 = vmatprep.subr.mxu0 0.0
        %1230 = vmatpush2.msra.mxu0 0.0
        %1231 = vmatprep.subr.mxu0 0.0
        %1232 = vmatpush2.msra.mxu0 0.0
        %1233 = vmatprep.subr.mxu0 0.0
        %1234 = vmatpush2.msra.mxu0 0.0
        %1235 = vmatprep.subr.mxu0 0.0
        %1236 = vmatpush2.msra.mxu0 0.0
        %1237 = vmatprep.subr.mxu0 0.0
        %1238 = vmatpush2.msra.mxu0 0.0
        %1239 = vmatprep.subr.mxu0 0.0
        %1240 = vmatpush2.msra.mxu0 0.0
        %1241 = vmatprep.subr.mxu0 0.0
        %1242 = vmatpush2.msra.mxu0 0.0
        %1243 = vmatprep.subr.mxu0 0.0
        %1244 = vmatpush2.msra.mxu0 0.0
        %1245 = vmatprep.subr.mxu0 0.0
        %1246 = vmatpush2.msra.mxu0 0.0
        %1247 = vmatprep.subr.mxu0 0.0
        %1248 = vmatpush2.msra.mxu0 0.0
        %1249 = vmatprep.subr.mxu0 0.0
        %1250 = vmatpush2.msra.mxu0 0.0
        %1251 = vmatprep.mubr.f32.mxu0 0.0
        %1252 = vmatmul.mubr.f32.gmra.mxu0 %v593
        %v1253 = vpop.f32.mrf.mxu0
        %v1254 = vadd.f32 %v574, %v1253
        %v1255 = vpop.f32.mrf.mxu0
        %v1256 = vadd.f32 %v574, %v1255
        %1257 = vmatprep.mubr.f32.mxu0 0.0
        %1258 = vmatmul.mubr.f32.gmra.mxu0 %v596
        %v1259 = vpop.f32.mrf.mxu0
        %v1260 = vadd.f32 %v579, %v1259
        %v1261 = vpop.f32.mrf.mxu0
        %v1262 = vadd.f32 %v579, %v1261
        %1263 = vmatprep.mubr.f32.mxu0 0.0
        %1264 = vmatmul.mubr.f32.gmra.mxu0 %v599
        %v1265 = vpop.f32.mrf.mxu0
        %v1266 = vadd.f32 %v584, %v1265
        %v1267 = vpop.f32.mrf.mxu0
        %v1268 = vadd.f32 %v584, %v1267
        %1269 = vmatprep.mubr.f32.mxu0 0.0
        %1270 = vmatmul.mubr.f32.gmra.mxu0 %v602
        %v1271 = vpop.f32.mrf.mxu0
        %v1272 = vadd.f32 %v589, %v1271
        %v1273 = vpop.f32.mrf.mxu0
        %v1274 = vadd.f32 %v589, %v1273
        %1275 = vdwg.mxu0
        %1276 = vmatprep.subr.mxu0 0.0
        %1277 = vmatpush1.msra.mxu0 0.0
        %1278 = vmatprep.subr.mxu0 0.0
        %1279 = vmatpush1.msra.mxu0 0.0
        %1280 = vmatprep.subr.mxu0 0.0
        %1281 = vmatpush1.msra.mxu0 0.0
        %1282 = vmatprep.subr.mxu0 0.0
        %1283 = vmatpush1.msra.mxu0 0.0
        %1284 = vmatprep.subr.mxu0 0.0
        %1285 = vmatpush1.msra.mxu0 0.0
        %1286 = vmatprep.subr.mxu0 0.0
        %1287 = vmatpush1.msra.mxu0 0.0
        %1288 = vmatprep.subr.mxu0 0.0
        %1289 = vmatpush1.msra.mxu0 0.0
        %1290 = vmatprep.subr.mxu0 0.0
        %1291 = vmatpush1.msra.mxu0 0.0
        %1292 = vmatprep.subr.mxu0 0.0
        %1293 = vmatpush1.msra.mxu0 0.0
        %1294 = vmatprep.subr.mxu0 0.0
        %1295 = vmatpush1.msra.mxu0 0.0
        %1296 = vmatprep.subr.mxu0 0.0
        %1297 = vmatpush1.msra.mxu0 0.0
        %1298 = vmatprep.subr.mxu0 %v651
        %1299 = vmatpush1.msra.mxu0 %v648
        %1300 = vmatprep.subr.mxu0 %v550
        %1301 = vmatpush1.msra.mxu0 %v549
        %1302 = vmatprep.subr.mxu0 %v534
        %1303 = vmatpush1.msra.mxu0 %v533
        %1304 = vmatprep.subr.mxu0 %v518
        %1305 = vmatpush1.msra.mxu0 %v517
        %1306 = vmatprep.subr.mxu0 %v502
        %1307 = vmatpush1.msra.mxu0 %v501
        %1308 = vmatprep.subr.mxu0 0.0
        %1309 = vmatpush2.msra.mxu0 0.0
        %1310 = vmatprep.subr.mxu0 0.0
        %1311 = vmatpush2.msra.mxu0 0.0
        %1312 = vmatprep.subr.mxu0 0.0
        %1313 = vmatpush2.msra.mxu0 0.0
        %1314 = vmatprep.subr.mxu0 0.0
        %1315 = vmatpush2.msra.mxu0 0.0
        %1316 = vmatprep.subr.mxu0 0.0
        %1317 = vmatpush2.msra.mxu0 0.0
        %1318 = vmatprep.subr.mxu0 0.0
        %1319 = vmatpush2.msra.mxu0 0.0
        %1320 = vmatprep.subr.mxu0 0.0
        %1321 = vmatpush2.msra.mxu0 0.0
        %1322 = vmatprep.subr.mxu0 0.0
        %1323 = vmatpush2.msra.mxu0 0.0
        %1324 = vmatprep.subr.mxu0 0.0
        %1325 = vmatpush2.msra.mxu0 0.0
        %1326 = vmatprep.subr.mxu0 0.0
        %1327 = vmatpush2.msra.mxu0 0.0
        %1328 = vmatprep.subr.mxu0 0.0
        %1329 = vmatpush2.msra.mxu0 0.0
        %1330 = vmatprep.subr.mxu0 0.0
        %1331 = vmatpush2.msra.mxu0 0.0
        %1332 = vmatprep.subr.mxu0 0.0
        %1333 = vmatpush2.msra.mxu0 0.0
        %1334 = vmatprep.subr.mxu0 0.0
        %1335 = vmatpush2.msra.mxu0 0.0
        %1336 = vmatprep.subr.mxu0 0.0
        %1337 = vmatpush2.msra.mxu0 0.0
        %1338 = vmatprep.subr.mxu0 0.0
        %1339 = vmatpush2.msra.mxu0 0.0
        %1340 = vmatprep.mubr.f32.mxu0 0.0
        %1341 = vmatmul.mubr.f32.gmra.mxu0 %v593
        %v1342 = vpop.f32.mrf.mxu0
        %v1343 = vadd.f32 %v574, %v1342
        %v1344 = vpop.f32.mrf.mxu0
        %v1345 = vadd.f32 %v574, %v1344
        %1346 = vmatprep.mubr.f32.mxu0 0.0
        %1347 = vmatmul.mubr.f32.gmra.mxu0 %v596
        %v1348 = vpop.f32.mrf.mxu0
        %v1349 = vadd.f32 %v579, %v1348
        %v1350 = vpop.f32.mrf.mxu0
        %v1351 = vadd.f32 %v579, %v1350
        %1352 = vmatprep.mubr.f32.mxu0 0.0
        %1353 = vmatmul.mubr.f32.gmra.mxu0 %v599
        %v1354 = vpop.f32.mrf.mxu0
        %v1355 = vadd.f32 %v584, %v1354
        %v1356 = vpop.f32.mrf.mxu0
        %v1357 = vadd.f32 %v584, %v1356
        %1358 = vmatprep.mubr.f32.mxu0 0.0
        %1359 = vmatmul.mubr.f32.gmra.mxu0 %v602
        %v1360 = vpop.f32.mrf.mxu0
        %v1361 = vadd.f32 %v589, %v1360
        %v1362 = vpop.f32.mrf.mxu0
        %v1363 = vadd.f32 %v589, %v1362
        %1364 = vdwg.mxu0
        %v1365 = vmax.f32 %v720, 0.0
        %v1366 = vmax.f32 %v722, 0.0
        %v1367 = vmax.f32 %v809, 0.0
        %v1368 = vmax.f32 %v811, 0.0
        %v1369 = vmax.f32 %v898, 0.0
        %v1370 = vmax.f32 %v900, 0.0
        %v1371 = vmax.f32 %v987, 0.0
        %v1372 = vmax.f32 %v989, 0.0
        %v1373 = vmax.f32 %v1076, 0.0
        %v1374 = vmax.f32 %v1078, 0.0
        %v1375 = vmax.f32 %v1165, 0.0
        %v1376 = vmax.f32 %v1167, 0.0
        %v1377 = vmax.f32 %v1254, 0.0
        %v1378 = vmax.f32 %v1256, 0.0
        %v1379 = vmax.f32 %v1343, 0.0
        %v1380 = vmax.f32 %v1345, 0.0
        %v1381 = vmax.f32 %v726, 0.0
        %v1382 = vmax.f32 %v728, 0.0
        %v1383 = vmax.f32 %v815, 0.0
        %v1384 = vmax.f32 %v817, 0.0
        %v1385 = vmax.f32 %v904, 0.0
        %v1386 = vmax.f32 %v906, 0.0
        %v1387 = vmax.f32 %v993, 0.0
        %v1388 = vmax.f32 %v995, 0.0
        %v1389 = vmax.f32 %v1082, 0.0
        %v1390 = vmax.f32 %v1084, 0.0
        %v1391 = vmax.f32 %v1171, 0.0
        %v1392 = vmax.f32 %v1173, 0.0
        %v1393 = vmax.f32 %v1260, 0.0
        %v1394 = vmax.f32 %v1262, 0.0
        %v1395 = vmax.f32 %v1349, 0.0
        %v1396 = vmax.f32 %v1351, 0.0
        %v1397 = vmax.f32 %v732, 0.0
        %v1398 = vmax.f32 %v734, 0.0
        %v1399 = vmax.f32 %v821, 0.0
        %v1400 = vmax.f32 %v823, 0.0
        %v1401 = vmax.f32 %v910, 0.0
        %v1402 = vmax.f32 %v912, 0.0
        %v1403 = vmax.f32 %v999, 0.0
        %v1404 = vmax.f32 %v1001, 0.0
        %v1405 = vmax.f32 %v1088, 0.0
        %v1406 = vmax.f32 %v1090, 0.0
        %v1407 = vmax.f32 %v1177, 0.0
        %v1408 = vmax.f32 %v1179, 0.0
        %v1409 = vmax.f32 %v1266, 0.0
        %v1410 = vmax.f32 %v1268, 0.0
        %v1411 = vmax.f32 %v1355, 0.0
        %v1412 = vmax.f32 %v1357, 0.0
        %v1413 = vmax.f32 %v738, 0.0
        %v1414 = vmax.f32 %v740, 0.0
        %v1415 = vmax.f32 %v827, 0.0
        %v1416 = vmax.f32 %v829, 0.0
        %v1417 = vmax.f32 %v916, 0.0
        %v1418 = vmax.f32 %v918, 0.0
        %v1419 = vmax.f32 %v1005, 0.0
        %v1420 = vmax.f32 %v1007, 0.0
        %v1421 = vmax.f32 %v1094, 0.0
        %v1422 = vmax.f32 %v1096, 0.0
        %v1423 = vmax.f32 %v1183, 0.0
        %v1424 = vmax.f32 %v1185, 0.0
        %v1425 = vmax.f32 %v1272, 0.0
        %v1426 = vmax.f32 %v1274, 0.0
        %v1427 = vmax.f32 %v1361, 0.0
        %v1428 = vmax.f32 %v1363, 0.0
        %v1429 = vld [vmem:[%s3] sm:$0xff]
        %v1430 = vld [vmem:[%s3 + $0x8] sm:$0xff]
        %v1431 = vld [vmem:[%s3 + $0x10] sm:$0xff]
        %v1432 = vld [vmem:[%s3 + $0x18] sm:$0xff]
        %v1433 = vld [vmem:[%s3 + $0x20] sm:$0xff]
        %v1434 = vld [vmem:[%s3 + $0x28] sm:$0xff]
        %v1435 = vld [vmem:[%s3 + $0x30] sm:$0xff]
        %v1436 = vld [vmem:[%s3 + $0x38] sm:$0xff]
        %v1437 = vld [vmem:[%s3 + $0x40] sm:$0xff]
        %v1438 = vld [vmem:[%s3 + $0x48] sm:$0xff]
        %v1439 = vld [vmem:[%s3 + $0x50] sm:$0xff]
        %v1440 = vld [vmem:[%s3 + $0x58] sm:$0xff]
        %v1441 = vld [vmem:[%s3 + $0x60] sm:$0xff]
        %v1442 = vld [vmem:[%s3 + $0x68] sm:$0xff]
        %v1443 = vld [vmem:[%s3 + $0x70] sm:$0xff]
        %v1444 = vld [vmem:[%s3 + $0x78] sm:$0xff]
        %1445 = vmatprep.subr.mxu0 0.0
        %1446 = vmatpush1.xpose.msra.mxu0 0.0
        %1447 = vmatprep.subr.mxu0 0.0
        %1448 = vmatpush1.xpose.msra.mxu0 0.0
        %1449 = vmatprep.subr.mxu0 0.0
        %1450 = vmatpush1.xpose.msra.mxu0 0.0
        %1451 = vmatprep.subr.mxu0 0.0
        %1452 = vmatpush1.xpose.msra.mxu0 0.0
        %1453 = vmatprep.subr.mxu0 0.0
        %1454 = vmatpush1.xpose.msra.mxu0 0.0
        %1455 = vmatprep.subr.mxu0 0.0
        %1456 = vmatpush1.xpose.msra.mxu0 0.0
        %1457 = vmatprep.subr.mxu0 0.0
        %1458 = vmatpush1.xpose.msra.mxu0 0.0
        %1459 = vmatprep.subr.mxu0 0.0
        %1460 = vmatpush1.xpose.msra.mxu0 0.0
        %1461 = vmatprep.subr.mxu0 0.0
        %1462 = vmatpush1.xpose.msra.mxu0 0.0
        %1463 = vmatprep.subr.mxu0 0.0
        %1464 = vmatpush1.xpose.msra.mxu0 0.0
        %1465 = vmatprep.subr.mxu0 0.0
        %1466 = vmatpush1.xpose.msra.mxu0 0.0
        %1467 = vmatprep.subr.mxu0 0.0
        %1468 = vmatpush1.xpose.msra.mxu0 0.0
        %1469 = vmatprep.subr.mxu0 %v1414
        %1470 = vmatpush1.xpose.msra.mxu0 %v1413
        %1471 = vmatprep.subr.mxu0 %v1398
        %1472 = vmatpush1.xpose.msra.mxu0 %v1397
        %1473 = vmatprep.subr.mxu0 %v1382
        %1474 = vmatpush1.xpose.msra.mxu0 %v1381
        %1475 = vmatprep.subr.mxu0 %v1366
        %1476 = vmatpush1.xpose.msra.mxu0 %v1365
        %1477 = vmatprep.subr.mxu0 0.0
        %1478 = vmatpush2.xpose.msra.mxu0 0.0
        %1479 = vmatprep.subr.mxu0 0.0
        %1480 = vmatpush2.xpose.msra.mxu0 0.0
        %1481 = vmatprep.subr.mxu0 0.0
        %1482 = vmatpush2.xpose.msra.mxu0 0.0
        %1483 = vmatprep.subr.mxu0 0.0
        %1484 = vmatpush2.xpose.msra.mxu0 0.0
        %1485 = vmatprep.subr.mxu0 0.0
        %1486 = vmatpush2.xpose.msra.mxu0 0.0
        %1487 = vmatprep.subr.mxu0 0.0
        %1488 = vmatpush2.xpose.msra.mxu0 0.0
        %1489 = vmatprep.subr.mxu0 0.0
        %1490 = vmatpush2.xpose.msra.mxu0 0.0
        %1491 = vmatprep.subr.mxu0 0.0
        %1492 = vmatpush2.xpose.msra.mxu0 0.0
        %1493 = vmatprep.subr.mxu0 0.0
        %1494 = vmatpush2.xpose.msra.mxu0 0.0
        %1495 = vmatprep.subr.mxu0 0.0
        %1496 = vmatpush2.xpose.msra.mxu0 0.0
        %1497 = vmatprep.subr.mxu0 0.0
        %1498 = vmatpush2.xpose.msra.mxu0 0.0
        %1499 = vmatprep.subr.mxu0 0.0
        %1500 = vmatpush2.xpose.msra.mxu0 0.0
        %1501 = vmatprep.subr.mxu0 0.0
        %1502 = vmatpush2.xpose.msra.mxu0 0.0
        %1503 = vmatprep.subr.mxu0 0.0
        %1504 = vmatpush2.xpose.msra.mxu0 0.0
        %1505 = vmatprep.subr.mxu0 0.0
        %1506 = vmatpush2.xpose.msra.mxu0 0.0
        %1507 = vmatprep.subr.mxu0 0.0
        %1508 = vmatpush2.xpose.msra.mxu0 0.0
        %1509 = vmatprep.mubr.f32.mxu0 %v1430
        %1510 = vmatmul.mubr.f32.gmra.mxu0 %v1429
        %v1511 = vpop.f32.mrf.mxu0
        %v1512 = vadd.f32 0.0, %v1511
        %v1513 = vpop.f32.mrf.mxu0
        %1514 = vdwg.mxu0
        %1515 = vmatprep.subr.mxu0 0.0
        %1516 = vmatpush1.xpose.msra.mxu0 0.0
        %1517 = vmatprep.subr.mxu0 0.0
        %1518 = vmatpush1.xpose.msra.mxu0 0.0
        %1519 = vmatprep.subr.mxu0 0.0
        %1520 = vmatpush1.xpose.msra.mxu0 0.0
        %1521 = vmatprep.subr.mxu0 0.0
        %1522 = vmatpush1.xpose.msra.mxu0 0.0
        %1523 = vmatprep.subr.mxu0 0.0
        %1524 = vmatpush1.xpose.msra.mxu0 0.0
        %1525 = vmatprep.subr.mxu0 0.0
        %1526 = vmatpush1.xpose.msra.mxu0 0.0
        %1527 = vmatprep.subr.mxu0 0.0
        %1528 = vmatpush1.xpose.msra.mxu0 0.0
        %1529 = vmatprep.subr.mxu0 0.0
        %1530 = vmatpush1.xpose.msra.mxu0 0.0
        %1531 = vmatprep.subr.mxu0 0.0
        %1532 = vmatpush1.xpose.msra.mxu0 0.0
        %1533 = vmatprep.subr.mxu0 0.0
        %1534 = vmatpush1.xpose.msra.mxu0 0.0
        %1535 = vmatprep.subr.mxu0 0.0
        %1536 = vmatpush1.xpose.msra.mxu0 0.0
        %1537 = vmatprep.subr.mxu0 0.0
        %1538 = vmatpush1.xpose.msra.mxu0 0.0
        %1539 = vmatprep.subr.mxu0 %v1416
        %1540 = vmatpush1.xpose.msra.mxu0 %v1415
        %1541 = vmatprep.subr.mxu0 %v1400
        %1542 = vmatpush1.xpose.msra.mxu0 %v1399
        %1543 = vmatprep.subr.mxu0 %v1384
        %1544 = vmatpush1.xpose.msra.mxu0 %v1383
        %1545 = vmatprep.subr.mxu0 %v1368
        %1546 = vmatpush1.xpose.msra.mxu0 %v1367
        %1547 = vmatprep.subr.mxu0 0.0
        %1548 = vmatpush2.xpose.msra.mxu0 0.0
        %1549 = vmatprep.subr.mxu0 0.0
        %1550 = vmatpush2.xpose.msra.mxu0 0.0
        %1551 = vmatprep.subr.mxu0 0.0
        %1552 = vmatpush2.xpose.msra.mxu0 0.0
        %1553 = vmatprep.subr.mxu0 0.0
        %1554 = vmatpush2.xpose.msra.mxu0 0.0
        %1555 = vmatprep.subr.mxu0 0.0
        %1556 = vmatpush2.xpose.msra.mxu0 0.0
        %1557 = vmatprep.subr.mxu0 0.0
        %1558 = vmatpush2.xpose.msra.mxu0 0.0
        %1559 = vmatprep.subr.mxu0 0.0
        %1560 = vmatpush2.xpose.msra.mxu0 0.0
        %1561 = vmatprep.subr.mxu0 0.0
        %1562 = vmatpush2.xpose.msra.mxu0 0.0
        %1563 = vmatprep.subr.mxu0 0.0
        %1564 = vmatpush2.xpose.msra.mxu0 0.0
        %1565 = vmatprep.subr.mxu0 0.0
        %1566 = vmatpush2.xpose.msra.mxu0 0.0
        %1567 = vmatprep.subr.mxu0 0.0
        %1568 = vmatpush2.xpose.msra.mxu0 0.0
        %1569 = vmatprep.subr.mxu0 0.0
        %1570 = vmatpush2.xpose.msra.mxu0 0.0
        %1571 = vmatprep.subr.mxu0 0.0
        %1572 = vmatpush2.xpose.msra.mxu0 0.0
        %1573 = vmatprep.subr.mxu0 0.0
        %1574 = vmatpush2.xpose.msra.mxu0 0.0
        %1575 = vmatprep.subr.mxu0 0.0
        %1576 = vmatpush2.xpose.msra.mxu0 0.0
        %1577 = vmatprep.subr.mxu0 0.0
        %1578 = vmatpush2.xpose.msra.mxu0 0.0
        %1579 = vmatprep.mubr.f32.mxu0 %v1432
        %1580 = vmatmul.mubr.f32.gmra.mxu0 %v1431
        %v1581 = vpop.f32.mrf.mxu0
        %v1582 = vadd.f32 %v1512, %v1581
        %v1583 = vpop.f32.mrf.mxu0
        %1584 = vdwg.mxu0
        %1585 = vmatprep.subr.mxu0 0.0
        %1586 = vmatpush1.xpose.msra.mxu0 0.0
        %1587 = vmatprep.subr.mxu0 0.0
        %1588 = vmatpush1.xpose.msra.mxu0 0.0
        %1589 = vmatprep.subr.mxu0 0.0
        %1590 = vmatpush1.xpose.msra.mxu0 0.0
        %1591 = vmatprep.subr.mxu0 0.0
        %1592 = vmatpush1.xpose.msra.mxu0 0.0
        %1593 = vmatprep.subr.mxu0 0.0
        %1594 = vmatpush1.xpose.msra.mxu0 0.0
        %1595 = vmatprep.subr.mxu0 0.0
        %1596 = vmatpush1.xpose.msra.mxu0 0.0
        %1597 = vmatprep.subr.mxu0 0.0
        %1598 = vmatpush1.xpose.msra.mxu0 0.0
        %1599 = vmatprep.subr.mxu0 0.0
        %1600 = vmatpush1.xpose.msra.mxu0 0.0
        %1601 = vmatprep.subr.mxu0 0.0
        %1602 = vmatpush1.xpose.msra.mxu0 0.0
        %1603 = vmatprep.subr.mxu0 0.0
        %1604 = vmatpush1.xpose.msra.mxu0 0.0
        %1605 = vmatprep.subr.mxu0 0.0
        %1606 = vmatpush1.xpose.msra.mxu0 0.0
        %1607 = vmatprep.subr.mxu0 0.0
        %1608 = vmatpush1.xpose.msra.mxu0 0.0
        %1609 = vmatprep.subr.mxu0 %v1418
        %1610 = vmatpush1.xpose.msra.mxu0 %v1417
        %1611 = vmatprep.subr.mxu0 %v1402
        %1612 = vmatpush1.xpose.msra.mxu0 %v1401
        %1613 = vmatprep.subr.mxu0 %v1386
        %1614 = vmatpush1.xpose.msra.mxu0 %v1385
        %1615 = vmatprep.subr.mxu0 %v1370
        %1616 = vmatpush1.xpose.msra.mxu0 %v1369
        %1617 = vmatprep.subr.mxu0 0.0
        %1618 = vmatpush2.xpose.msra.mxu0 0.0
        %1619 = vmatprep.subr.mxu0 0.0
        %1620 = vmatpush2.xpose.msra.mxu0 0.0
        %1621 = vmatprep.subr.mxu0 0.0
        %1622 = vmatpush2.xpose.msra.mxu0 0.0
        %1623 = vmatprep.subr.mxu0 0.0
        %1624 = vmatpush2.xpose.msra.mxu0 0.0
        %1625 = vmatprep.subr.mxu0 0.0
        %1626 = vmatpush2.xpose.msra.mxu0 0.0
        %1627 = vmatprep.subr.mxu0 0.0
        %1628 = vmatpush2.xpose.msra.mxu0 0.0
        %1629 = vmatprep.subr.mxu0 0.0
        %1630 = vmatpush2.xpose.msra.mxu0 0.0
        %1631 = vmatprep.subr.mxu0 0.0
        %1632 = vmatpush2.xpose.msra.mxu0 0.0
        %1633 = vmatprep.subr.mxu0 0.0
        %1634 = vmatpush2.xpose.msra.mxu0 0.0
        %1635 = vmatprep.subr.mxu0 0.0
        %1636 = vmatpush2.xpose.msra.mxu0 0.0
        %1637 = vmatprep.subr.mxu0 0.0
        %1638 = vmatpush2.xpose.msra.mxu0 0.0
        %1639 = vmatprep.subr.mxu0 0.0
        %1640 = vmatpush2.xpose.msra.mxu0 0.0
        %1641 = vmatprep.subr.mxu0 0.0
        %1642 = vmatpush2.xpose.msra.mxu0 0.0
        %1643 = vmatprep.subr.mxu0 0.0
        %1644 = vmatpush2.xpose.msra.mxu0 0.0
        %1645 = vmatprep.subr.mxu0 0.0
        %1646 = vmatpush2.xpose.msra.mxu0 0.0
        %1647 = vmatprep.subr.mxu0 0.0
        %1648 = vmatpush2.xpose.msra.mxu0 0.0
        %1649 = vmatprep.mubr.f32.mxu0 %v1434
        %1650 = vmatmul.mubr.f32.gmra.mxu0 %v1433
        %v1651 = vpop.f32.mrf.mxu0
        %v1652 = vadd.f32 %v1582, %v1651
        %v1653 = vpop.f32.mrf.mxu0
        %1654 = vdwg.mxu0
        %1655 = vmatprep.subr.mxu0 0.0
        %1656 = vmatpush1.xpose.msra.mxu0 0.0
        %1657 = vmatprep.subr.mxu0 0.0
        %1658 = vmatpush1.xpose.msra.mxu0 0.0
        %1659 = vmatprep.subr.mxu0 0.0
        %1660 = vmatpush1.xpose.msra.mxu0 0.0
        %1661 = vmatprep.subr.mxu0 0.0
        %1662 = vmatpush1.xpose.msra.mxu0 0.0
        %1663 = vmatprep.subr.mxu0 0.0
        %1664 = vmatpush1.xpose.msra.mxu0 0.0
        %1665 = vmatprep.subr.mxu0 0.0
        %1666 = vmatpush1.xpose.msra.mxu0 0.0
        %1667 = vmatprep.subr.mxu0 0.0
        %1668 = vmatpush1.xpose.msra.mxu0 0.0
        %1669 = vmatprep.subr.mxu0 0.0
        %1670 = vmatpush1.xpose.msra.mxu0 0.0
        %1671 = vmatprep.subr.mxu0 0.0
        %1672 = vmatpush1.xpose.msra.mxu0 0.0
        %1673 = vmatprep.subr.mxu0 0.0
        %1674 = vmatpush1.xpose.msra.mxu0 0.0
        %1675 = vmatprep.subr.mxu0 0.0
        %1676 = vmatpush1.xpose.msra.mxu0 0.0
        %1677 = vmatprep.subr.mxu0 0.0
        %1678 = vmatpush1.xpose.msra.mxu0 0.0
        %1679 = vmatprep.subr.mxu0 %v1420
        %1680 = vmatpush1.xpose.msra.mxu0 %v1419
        %1681 = vmatprep.subr.mxu0 %v1404
        %1682 = vmatpush1.xpose.msra.mxu0 %v1403
        %1683 = vmatprep.subr.mxu0 %v1388
        %1684 = vmatpush1.xpose.msra.mxu0 %v1387
        %1685 = vmatprep.subr.mxu0 %v1372
        %1686 = vmatpush1.xpose.msra.mxu0 %v1371
        %1687 = vmatprep.subr.mxu0 0.0
        %1688 = vmatpush2.xpose.msra.mxu0 0.0
        %1689 = vmatprep.subr.mxu0 0.0
        %1690 = vmatpush2.xpose.msra.mxu0 0.0
        %1691 = vmatprep.subr.mxu0 0.0
        %1692 = vmatpush2.xpose.msra.mxu0 0.0
        %1693 = vmatprep.subr.mxu0 0.0
        %1694 = vmatpush2.xpose.msra.mxu0 0.0
        %1695 = vmatprep.subr.mxu0 0.0
        %1696 = vmatpush2.xpose.msra.mxu0 0.0
        %1697 = vmatprep.subr.mxu0 0.0
        %1698 = vmatpush2.xpose.msra.mxu0 0.0
        %1699 = vmatprep.subr.mxu0 0.0
        %1700 = vmatpush2.xpose.msra.mxu0 0.0
        %1701 = vmatprep.subr.mxu0 0.0
        %1702 = vmatpush2.xpose.msra.mxu0 0.0
        %1703 = vmatprep.subr.mxu0 0.0
        %1704 = vmatpush2.xpose.msra.mxu0 0.0
        %1705 = vmatprep.subr.mxu0 0.0
        %1706 = vmatpush2.xpose.msra.mxu0 0.0
        %1707 = vmatprep.subr.mxu0 0.0
        %1708 = vmatpush2.xpose.msra.mxu0 0.0
        %1709 = vmatprep.subr.mxu0 0.0
        %1710 = vmatpush2.xpose.msra.mxu0 0.0
        %1711 = vmatprep.subr.mxu0 0.0
        %1712 = vmatpush2.xpose.msra.mxu0 0.0
        %1713 = vmatprep.subr.mxu0 0.0
        %1714 = vmatpush2.xpose.msra.mxu0 0.0
        %1715 = vmatprep.subr.mxu0 0.0
        %1716 = vmatpush2.xpose.msra.mxu0 0.0
        %1717 = vmatprep.subr.mxu0 0.0
        %1718 = vmatpush2.xpose.msra.mxu0 0.0
        %1719 = vmatprep.mubr.f32.mxu0 %v1436
        %1720 = vmatmul.mubr.f32.gmra.mxu0 %v1435
        %v1721 = vpop.f32.mrf.mxu0
        %v1722 = vadd.f32 %v1652, %v1721
        %v1723 = vpop.f32.mrf.mxu0
        %1724 = vdwg.mxu0
        %1725 = vmatprep.subr.mxu0 0.0
        %1726 = vmatpush1.xpose.msra.mxu0 0.0
        %1727 = vmatprep.subr.mxu0 0.0
        %1728 = vmatpush1.xpose.msra.mxu0 0.0
        %1729 = vmatprep.subr.mxu0 0.0
        %1730 = vmatpush1.xpose.msra.mxu0 0.0
        %1731 = vmatprep.subr.mxu0 0.0
        %1732 = vmatpush1.xpose.msra.mxu0 0.0
        %1733 = vmatprep.subr.mxu0 0.0
        %1734 = vmatpush1.xpose.msra.mxu0 0.0
        %1735 = vmatprep.subr.mxu0 0.0
        %1736 = vmatpush1.xpose.msra.mxu0 0.0
        %1737 = vmatprep.subr.mxu0 0.0
        %1738 = vmatpush1.xpose.msra.mxu0 0.0
        %1739 = vmatprep.subr.mxu0 0.0
        %1740 = vmatpush1.xpose.msra.mxu0 0.0
        %1741 = vmatprep.subr.mxu0 0.0
        %1742 = vmatpush1.xpose.msra.mxu0 0.0
        %1743 = vmatprep.subr.mxu0 0.0
        %1744 = vmatpush1.xpose.msra.mxu0 0.0
        %1745 = vmatprep.subr.mxu0 0.0
        %1746 = vmatpush1.xpose.msra.mxu0 0.0
        %1747 = vmatprep.subr.mxu0 0.0
        %1748 = vmatpush1.xpose.msra.mxu0 0.0
        %1749 = vmatprep.subr.mxu0 %v1422
        %1750 = vmatpush1.xpose.msra.mxu0 %v1421
        %1751 = vmatprep.subr.mxu0 %v1406
        %1752 = vmatpush1.xpose.msra.mxu0 %v1405
        %1753 = vmatprep.subr.mxu0 %v1390
        %1754 = vmatpush1.xpose.msra.mxu0 %v1389
        %1755 = vmatprep.subr.mxu0 %v1374
        %1756 = vmatpush1.xpose.msra.mxu0 %v1373
        %1757 = vmatprep.subr.mxu0 0.0
        %1758 = vmatpush2.xpose.msra.mxu0 0.0
        %1759 = vmatprep.subr.mxu0 0.0
        %1760 = vmatpush2.xpose.msra.mxu0 0.0
        %1761 = vmatprep.subr.mxu0 0.0
        %1762 = vmatpush2.xpose.msra.mxu0 0.0
        %1763 = vmatprep.subr.mxu0 0.0
        %1764 = vmatpush2.xpose.msra.mxu0 0.0
        %1765 = vmatprep.subr.mxu0 0.0
        %1766 = vmatpush2.xpose.msra.mxu0 0.0
        %1767 = vmatprep.subr.mxu0 0.0
        %1768 = vmatpush2.xpose.msra.mxu0 0.0
        %1769 = vmatprep.subr.mxu0 0.0
        %1770 = vmatpush2.xpose.msra.mxu0 0.0
        %1771 = vmatprep.subr.mxu0 0.0
        %1772 = vmatpush2.xpose.msra.mxu0 0.0
        %1773 = vmatprep.subr.mxu0 0.0
        %1774 = vmatpush2.xpose.msra.mxu0 0.0
        %1775 = vmatprep.subr.mxu0 0.0
        %1776 = vmatpush2.xpose.msra.mxu0 0.0
        %1777 = vmatprep.subr.mxu0 0.0
        %1778 = vmatpush2.xpose.msra.mxu0 0.0
        %1779 = vmatprep.subr.mxu0 0.0
        %1780 = vmatpush2.xpose.msra.mxu0 0.0
        %1781 = vmatprep.subr.mxu0 0.0
        %1782 = vmatpush2.xpose.msra.mxu0 0.0
        %1783 = vmatprep.subr.mxu0 0.0
        %1784 = vmatpush2.xpose.msra.mxu0 0.0
        %1785 = vmatprep.subr.mxu0 0.0
        %1786 = vmatpush2.xpose.msra.mxu0 0.0
        %1787 = vmatprep.subr.mxu0 0.0
        %1788 = vmatpush2.xpose.msra.mxu0 0.0
        %1789 = vmatprep.mubr.f32.mxu0 %v1438
        %1790 = vmatmul.mubr.f32.gmra.mxu0 %v1437
        %v1791 = vpop.f32.mrf.mxu0
        %v1792 = vadd.f32 %v1722, %v1791
        %v1793 = vpop.f32.mrf.mxu0
        %1794 = vdwg.mxu0
        %1795 = vmatprep.subr.mxu0 0.0
        %1796 = vmatpush1.xpose.msra.mxu0 0.0
        %1797 = vmatprep.subr.mxu0 0.0
        %1798 = vmatpush1.xpose.msra.mxu0 0.0
        %1799 = vmatprep.subr.mxu0 0.0
        %1800 = vmatpush1.xpose.msra.mxu0 0.0
        %1801 = vmatprep.subr.mxu0 0.0
        %1802 = vmatpush1.xpose.msra.mxu0 0.0
        %1803 = vmatprep.subr.mxu0 0.0
        %1804 = vmatpush1.xpose.msra.mxu0 0.0
        %1805 = vmatprep.subr.mxu0 0.0
        %1806 = vmatpush1.xpose.msra.mxu0 0.0
        %1807 = vmatprep.subr.mxu0 0.0
        %1808 = vmatpush1.xpose.msra.mxu0 0.0
        %1809 = vmatprep.subr.mxu0 0.0
        %1810 = vmatpush1.xpose.msra.mxu0 0.0
        %1811 = vmatprep.subr.mxu0 0.0
        %1812 = vmatpush1.xpose.msra.mxu0 0.0
        %1813 = vmatprep.subr.mxu0 0.0
        %1814 = vmatpush1.xpose.msra.mxu0 0.0
        %1815 = vmatprep.subr.mxu0 0.0
        %1816 = vmatpush1.xpose.msra.mxu0 0.0
        %1817 = vmatprep.subr.mxu0 0.0
        %1818 = vmatpush1.xpose.msra.mxu0 0.0
        %1819 = vmatprep.subr.mxu0 %v1424
        %1820 = vmatpush1.xpose.msra.mxu0 %v1423
        %1821 = vmatprep.subr.mxu0 %v1408
        %1822 = vmatpush1.xpose.msra.mxu0 %v1407
        %1823 = vmatprep.subr.mxu0 %v1392
        %1824 = vmatpush1.xpose.msra.mxu0 %v1391
        %1825 = vmatprep.subr.mxu0 %v1376
        %1826 = vmatpush1.xpose.msra.mxu0 %v1375
        %1827 = vmatprep.subr.mxu0 0.0
        %1828 = vmatpush2.xpose.msra.mxu0 0.0
        %1829 = vmatprep.subr.mxu0 0.0
        %1830 = vmatpush2.xpose.msra.mxu0 0.0
        %1831 = vmatprep.subr.mxu0 0.0
        %1832 = vmatpush2.xpose.msra.mxu0 0.0
        %1833 = vmatprep.subr.mxu0 0.0
        %1834 = vmatpush2.xpose.msra.mxu0 0.0
        %1835 = vmatprep.subr.mxu0 0.0
        %1836 = vmatpush2.xpose.msra.mxu0 0.0
        %1837 = vmatprep.subr.mxu0 0.0
        %1838 = vmatpush2.xpose.msra.mxu0 0.0
        %1839 = vmatprep.subr.mxu0 0.0
        %1840 = vmatpush2.xpose.msra.mxu0 0.0
        %1841 = vmatprep.subr.mxu0 0.0
        %1842 = vmatpush2.xpose.msra.mxu0 0.0
        %1843 = vmatprep.subr.mxu0 0.0
        %1844 = vmatpush2.xpose.msra.mxu0 0.0
        %1845 = vmatprep.subr.mxu0 0.0
        %1846 = vmatpush2.xpose.msra.mxu0 0.0
        %1847 = vmatprep.subr.mxu0 0.0
        %1848 = vmatpush2.xpose.msra.mxu0 0.0
        %1849 = vmatprep.subr.mxu0 0.0
        %1850 = vmatpush2.xpose.msra.mxu0 0.0
        %1851 = vmatprep.subr.mxu0 0.0
        %1852 = vmatpush2.xpose.msra.mxu0 0.0
        %1853 = vmatprep.subr.mxu0 0.0
        %1854 = vmatpush2.xpose.msra.mxu0 0.0
        %1855 = vmatprep.subr.mxu0 0.0
        %1856 = vmatpush2.xpose.msra.mxu0 0.0
        %1857 = vmatprep.subr.mxu0 0.0
        %1858 = vmatpush2.xpose.msra.mxu0 0.0
        %1859 = vmatprep.mubr.f32.mxu0 %v1440
        %1860 = vmatmul.mubr.f32.gmra.mxu0 %v1439
        %v1861 = vpop.f32.mrf.mxu0
        %v1862 = vadd.f32 %v1792, %v1861
        %v1863 = vpop.f32.mrf.mxu0
        %1864 = vdwg.mxu0
        %1865 = vmatprep.subr.mxu0 0.0
        %1866 = vmatpush1.xpose.msra.mxu0 0.0
        %1867 = vmatprep.subr.mxu0 0.0
        %1868 = vmatpush1.xpose.msra.mxu0 0.0
        %1869 = vmatprep.subr.mxu0 0.0
        %1870 = vmatpush1.xpose.msra.mxu0 0.0
        %1871 = vmatprep.subr.mxu0 0.0
        %1872 = vmatpush1.xpose.msra.mxu0 0.0
        %1873 = vmatprep.subr.mxu0 0.0
        %1874 = vmatpush1.xpose.msra.mxu0 0.0
        %1875 = vmatprep.subr.mxu0 0.0
        %1876 = vmatpush1.xpose.msra.mxu0 0.0
        %1877 = vmatprep.subr.mxu0 0.0
        %1878 = vmatpush1.xpose.msra.mxu0 0.0
        %1879 = vmatprep.subr.mxu0 0.0
        %1880 = vmatpush1.xpose.msra.mxu0 0.0
        %1881 = vmatprep.subr.mxu0 0.0
        %1882 = vmatpush1.xpose.msra.mxu0 0.0
        %1883 = vmatprep.subr.mxu0 0.0
        %1884 = vmatpush1.xpose.msra.mxu0 0.0
        %1885 = vmatprep.subr.mxu0 0.0
        %1886 = vmatpush1.xpose.msra.mxu0 0.0
        %1887 = vmatprep.subr.mxu0 0.0
        %1888 = vmatpush1.xpose.msra.mxu0 0.0
        %1889 = vmatprep.subr.mxu0 %v1426
        %1890 = vmatpush1.xpose.msra.mxu0 %v1425
        %1891 = vmatprep.subr.mxu0 %v1410
        %1892 = vmatpush1.xpose.msra.mxu0 %v1409
        %1893 = vmatprep.subr.mxu0 %v1394
        %1894 = vmatpush1.xpose.msra.mxu0 %v1393
        %1895 = vmatprep.subr.mxu0 %v1378
        %1896 = vmatpush1.xpose.msra.mxu0 %v1377
        %1897 = vmatprep.subr.mxu0 0.0
        %1898 = vmatpush2.xpose.msra.mxu0 0.0
        %1899 = vmatprep.subr.mxu0 0.0
        %1900 = vmatpush2.xpose.msra.mxu0 0.0
        %1901 = vmatprep.subr.mxu0 0.0
        %1902 = vmatpush2.xpose.msra.mxu0 0.0
        %1903 = vmatprep.subr.mxu0 0.0
        %1904 = vmatpush2.xpose.msra.mxu0 0.0
        %1905 = vmatprep.subr.mxu0 0.0
        %1906 = vmatpush2.xpose.msra.mxu0 0.0
        %1907 = vmatprep.subr.mxu0 0.0
        %1908 = vmatpush2.xpose.msra.mxu0 0.0
        %1909 = vmatprep.subr.mxu0 0.0
        %1910 = vmatpush2.xpose.msra.mxu0 0.0
        %1911 = vmatprep.subr.mxu0 0.0
        %1912 = vmatpush2.xpose.msra.mxu0 0.0
        %1913 = vmatprep.subr.mxu0 0.0
        %1914 = vmatpush2.xpose.msra.mxu0 0.0
        %1915 = vmatprep.subr.mxu0 0.0
        %1916 = vmatpush2.xpose.msra.mxu0 0.0
        %1917 = vmatprep.subr.mxu0 0.0
        %1918 = vmatpush2.xpose.msra.mxu0 0.0
        %1919 = vmatprep.subr.mxu0 0.0
        %1920 = vmatpush2.xpose.msra.mxu0 0.0
        %1921 = vmatprep.subr.mxu0 0.0
        %1922 = vmatpush2.xpose.msra.mxu0 0.0
        %1923 = vmatprep.subr.mxu0 0.0
        %1924 = vmatpush2.xpose.msra.mxu0 0.0
        %1925 = vmatprep.subr.mxu0 0.0
        %1926 = vmatpush2.xpose.msra.mxu0 0.0
        %1927 = vmatprep.subr.mxu0 0.0
        %1928 = vmatpush2.xpose.msra.mxu0 0.0
        %1929 = vmatprep.mubr.f32.mxu0 %v1442
        %1930 = vmatmul.mubr.f32.gmra.mxu0 %v1441
        %v1931 = vpop.f32.mrf.mxu0
        %v1932 = vadd.f32 %v1862, %v1931
        %v1933 = vpop.f32.mrf.mxu0
        %1934 = vdwg.mxu0
        %1935 = vmatprep.subr.mxu0 0.0
        %1936 = vmatpush1.xpose.msra.mxu0 0.0
        %1937 = vmatprep.subr.mxu0 0.0
        %1938 = vmatpush1.xpose.msra.mxu0 0.0
        %1939 = vmatprep.subr.mxu0 0.0
        %1940 = vmatpush1.xpose.msra.mxu0 0.0
        %1941 = vmatprep.subr.mxu0 0.0
        %1942 = vmatpush1.xpose.msra.mxu0 0.0
        %1943 = vmatprep.subr.mxu0 0.0
        %1944 = vmatpush1.xpose.msra.mxu0 0.0
        %1945 = vmatprep.subr.mxu0 0.0
        %1946 = vmatpush1.xpose.msra.mxu0 0.0
        %1947 = vmatprep.subr.mxu0 0.0
        %1948 = vmatpush1.xpose.msra.mxu0 0.0
        %1949 = vmatprep.subr.mxu0 0.0
        %1950 = vmatpush1.xpose.msra.mxu0 0.0
        %1951 = vmatprep.subr.mxu0 0.0
        %1952 = vmatpush1.xpose.msra.mxu0 0.0
        %1953 = vmatprep.subr.mxu0 0.0
        %1954 = vmatpush1.xpose.msra.mxu0 0.0
        %1955 = vmatprep.subr.mxu0 0.0
        %1956 = vmatpush1.xpose.msra.mxu0 0.0
        %1957 = vmatprep.subr.mxu0 0.0
        %1958 = vmatpush1.xpose.msra.mxu0 0.0
        %1959 = vmatprep.subr.mxu0 %v1428
        %1960 = vmatpush1.xpose.msra.mxu0 %v1427
        %1961 = vmatprep.subr.mxu0 %v1412
        %1962 = vmatpush1.xpose.msra.mxu0 %v1411
        %1963 = vmatprep.subr.mxu0 %v1396
        %1964 = vmatpush1.xpose.msra.mxu0 %v1395
        %1965 = vmatprep.subr.mxu0 %v1380
        %1966 = vmatpush1.xpose.msra.mxu0 %v1379
        %1967 = vmatprep.subr.mxu0 0.0
        %1968 = vmatpush2.xpose.msra.mxu0 0.0
        %1969 = vmatprep.subr.mxu0 0.0
        %1970 = vmatpush2.xpose.msra.mxu0 0.0
        %1971 = vmatprep.subr.mxu0 0.0
        %1972 = vmatpush2.xpose.msra.mxu0 0.0
        %1973 = vmatprep.subr.mxu0 0.0
        %1974 = vmatpush2.xpose.msra.mxu0 0.0
        %1975 = vmatprep.subr.mxu0 0.0
        %1976 = vmatpush2.xpose.msra.mxu0 0.0
        %1977 = vmatprep.subr.mxu0 0.0
        %1978 = vmatpush2.xpose.msra.mxu0 0.0
        %1979 = vmatprep.subr.mxu0 0.0
        %1980 = vmatpush2.xpose.msra.mxu0 0.0
        %1981 = vmatprep.subr.mxu0 0.0
        %1982 = vmatpush2.xpose.msra.mxu0 0.0
        %1983 = vmatprep.subr.mxu0 0.0
        %1984 = vmatpush2.xpose.msra.mxu0 0.0
        %1985 = vmatprep.subr.mxu0 0.0
        %1986 = vmatpush2.xpose.msra.mxu0 0.0
        %1987 = vmatprep.subr.mxu0 0.0
        %1988 = vmatpush2.xpose.msra.mxu0 0.0
        %1989 = vmatprep.subr.mxu0 0.0
        %1990 = vmatpush2.xpose.msra.mxu0 0.0
        %1991 = vmatprep.subr.mxu0 0.0
        %1992 = vmatpush2.xpose.msra.mxu0 0.0
        %1993 = vmatprep.subr.mxu0 0.0
        %1994 = vmatpush2.xpose.msra.mxu0 0.0
        %1995 = vmatprep.subr.mxu0 0.0
        %1996 = vmatpush2.xpose.msra.mxu0 0.0
        %1997 = vmatprep.subr.mxu0 0.0
        %1998 = vmatpush2.xpose.msra.mxu0 0.0
        %1999 = vmatprep.mubr.f32.mxu0 %v1444
        %2000 = vmatmul.mubr.f32.gmra.mxu0 %v1443
        %v2001 = vpop.f32.mrf.mxu0
        %v2002 = vadd.f32 %v1932, %v2001
        %v2003 = vpop.f32.mrf.mxu0
        %2004 = vdwg.mxu0
        %v2005 = vld [vmem:[%s4] sm:$0xff]
        %v2006 = vld [vmem:[%s4 + $0x8] sm:$0xff]
        %v2007 = vld [vmem:[%s4 + $0x10] sm:$0xff]
        %v2008 = vld [vmem:[%s4 + $0x18] sm:$0xff]
        %v2009 = vld [vmem:[%s5] sm:$0x1]
        %v2011 = vlaneseq
        %v2012 = vshrl.u32 %v2011, 7
        %v2013 = vsub.s32 0, %v2012
        %v2014 = vrot.slane %v2009, %v2013
        %vm2016 = vcmask 261120
        %v2018 = vsel %vm2016, %v2002, 0
        %2020 = vmatprep.subr.mxu0 0.0
        %2021 = vmatpush1.msra.mxu0 0.0
        %2022 = vmatprep.subr.mxu0 0.0
        %2023 = vmatpush1.msra.mxu0 0.0
        %2024 = vmatprep.subr.mxu0 0.0
        %2025 = vmatpush1.msra.mxu0 0.0
        %2026 = vmatprep.subr.mxu0 0.0
        %2027 = vmatpush1.msra.mxu0 0.0
        %2028 = vmatprep.subr.mxu0 0.0
        %2029 = vmatpush1.msra.mxu0 0.0
        %2030 = vmatprep.subr.mxu0 0.0
        %2031 = vmatpush1.msra.mxu0 0.0
        %2032 = vmatprep.subr.mxu0 0.0
        %2033 = vmatpush1.msra.mxu0 0.0
        %2034 = vmatprep.subr.mxu0 0.0
        %2035 = vmatpush1.msra.mxu0 0.0
        %2036 = vmatprep.subr.mxu0 0.0
        %2037 = vmatpush1.msra.mxu0 0.0
        %2038 = vmatprep.subr.mxu0 0.0
        %2039 = vmatpush1.msra.mxu0 0.0
        %2040 = vmatprep.subr.mxu0 0.0
        %2041 = vmatpush1.msra.mxu0 0.0
        %2042 = vmatprep.subr.mxu0 0.0
        %2043 = vmatpush1.msra.mxu0 0.0
        %2044 = vmatprep.subr.mxu0 0.0
        %2045 = vmatpush1.msra.mxu0 %v2008
        %2046 = vmatprep.subr.mxu0 0.0
        %2047 = vmatpush1.msra.mxu0 %v2007
        %2048 = vmatprep.subr.mxu0 0.0
        %2049 = vmatpush1.msra.mxu0 %v2006
        %2050 = vmatprep.subr.mxu0 0.0
        %2051 = vmatpush1.msra.mxu0 %v2005
        %2052 = vmatprep.subr.mxu0 0.0
        %2053 = vmatpush2.msra.mxu0 0.0
        %2054 = vmatprep.subr.mxu0 0.0
        %2055 = vmatpush2.msra.mxu0 0.0
        %2056 = vmatprep.subr.mxu0 0.0
        %2057 = vmatpush2.msra.mxu0 0.0
        %2058 = vmatprep.subr.mxu0 0.0
        %2059 = vmatpush2.msra.mxu0 0.0
        %2060 = vmatprep.subr.mxu0 0.0
        %2061 = vmatpush2.msra.mxu0 0.0
        %2062 = vmatprep.subr.mxu0 0.0
        %2063 = vmatpush2.msra.mxu0 0.0
        %2064 = vmatprep.subr.mxu0 0.0
        %2065 = vmatpush2.msra.mxu0 0.0
        %2066 = vmatprep.subr.mxu0 0.0
        %2067 = vmatpush2.msra.mxu0 0.0
        %2068 = vmatprep.subr.mxu0 0.0
        %2069 = vmatpush2.msra.mxu0 0.0
        %2070 = vmatprep.subr.mxu0 0.0
        %2071 = vmatpush2.msra.mxu0 0.0
        %2072 = vmatprep.subr.mxu0 0.0
        %2073 = vmatpush2.msra.mxu0 0.0
        %2074 = vmatprep.subr.mxu0 0.0
        %2075 = vmatpush2.msra.mxu0 0.0
        %2076 = vmatprep.subr.mxu0 0.0
        %2077 = vmatpush2.msra.mxu0 0.0
        %2078 = vmatprep.subr.mxu0 0.0
        %2079 = vmatpush2.msra.mxu0 0.0
        %2080 = vmatprep.subr.mxu0 0.0
        %2081 = vmatpush2.msra.mxu0 0.0
        %2082 = vmatprep.subr.mxu0 0.0
        %2083 = vmatpush2.msra.mxu0 0.0
        %2084 = vmatprep.mubr.f32.mxu0 0.0
        %2085 = vmatmul.mubr.f32.gmra.mxu0 %v2018
        %v2086 = vpop.f32.mrf.mxu0
        %v2087 = vadd.f32 %v2014, %v2086
        %v2088 = vpop.f32.mrf.mxu0
        %2089 = vdwg.mxu0
        %v2090 = vmax.f32 %v2087, 0.0
        %v2091 = vld [vmem:[%s6] sm:$0xff]
        %v2092 = vld [vmem:[%s6 + $0x8] sm:$0xff]
        %v2093 = vld [vmem:[%s6 + $0x10] sm:$0xff]
        %v2094 = vld [vmem:[%s6 + $0x18] sm:$0xff]
        %v2095 = vld [vmem:[%s6 + $0x20] sm:$0xff]
        %v2096 = vld [vmem:[%s6 + $0x28] sm:$0xff]
        %v2097 = vld [vmem:[%s6 + $0x30] sm:$0xff]
        %v2098 = vld [vmem:[%s6 + $0x38] sm:$0xff]
        %v2099 = vld [vmem:[%s7] sm:$0x1]
        %v2101 = vlaneseq
        %v2102 = vshrl.u32 %v2101, 7
        %v2103 = vsub.s32 0, %v2102
        %v2104 = vrot.slane %v2099, %v2103
        %vm2106 = vcmask 523264
        %v2108 = vsel %vm2106, %v2090, 0
        %2110 = vmatprep.subr.mxu0 0.0
        %2111 = vmatpush1.msra.mxu0 0.0
        %2112 = vmatprep.subr.mxu0 0.0
        %2113 = vmatpush1.msra.mxu0 0.0
        %2114 = vmatprep.subr.mxu0 0.0
        %2115 = vmatpush1.msra.mxu0 0.0
        %2116 = vmatprep.subr.mxu0 0.0
        %2117 = vmatpush1.msra.mxu0 0.0
        %2118 = vmatprep.subr.mxu0 0.0
        %2119 = vmatpush1.msra.mxu0 0.0
        %2120 = vmatprep.subr.mxu0 0.0
        %2121 = vmatpush1.msra.mxu0 0.0
        %2122 = vmatprep.subr.mxu0 0.0
        %2123 = vmatpush1.msra.mxu0 0.0
        %2124 = vmatprep.subr.mxu0 0.0
        %2125 = vmatpush1.msra.mxu0 0.0
        %2126 = vmatprep.subr.mxu0 0.0
        %2127 = vmatpush1.msra.mxu0 %v2098
        %2128 = vmatprep.subr.mxu0 0.0
        %2129 = vmatpush1.msra.mxu0 %v2097
        %2130 = vmatprep.subr.mxu0 0.0
        %2131 = vmatpush1.msra.mxu0 %v2096
        %2132 = vmatprep.subr.mxu0 0.0
        %2133 = vmatpush1.msra.mxu0 %v2095
        %2134 = vmatprep.subr.mxu0 0.0
        %2135 = vmatpush1.msra.mxu0 %v2094
        %2136 = vmatprep.subr.mxu0 0.0
        %2137 = vmatpush1.msra.mxu0 %v2093
        %2138 = vmatprep.subr.mxu0 0.0
        %2139 = vmatpush1.msra.mxu0 %v2092
        %2140 = vmatprep.subr.mxu0 0.0
        %2141 = vmatpush1.msra.mxu0 %v2091
        %2142 = vmatprep.subr.mxu0 0.0
        %2143 = vmatpush2.msra.mxu0 0.0
        %2144 = vmatprep.subr.mxu0 0.0
        %2145 = vmatpush2.msra.mxu0 0.0
        %2146 = vmatprep.subr.mxu0 0.0
        %2147 = vmatpush2.msra.mxu0 0.0
        %2148 = vmatprep.subr.mxu0 0.0
        %2149 = vmatpush2.msra.mxu0 0.0
        %2150 = vmatprep.subr.mxu0 0.0
        %2151 = vmatpush2.msra.mxu0 0.0
        %2152 = vmatprep.subr.mxu0 0.0
        %2153 = vmatpush2.msra.mxu0 0.0
        %2154 = vmatprep.subr.mxu0 0.0
        %2155 = vmatpush2.msra.mxu0 0.0
        %2156 = vmatprep.subr.mxu0 0.0
        %2157 = vmatpush2.msra.mxu0 0.0
        %2158 = vmatprep.subr.mxu0 0.0
        %2159 = vmatpush2.msra.mxu0 0.0
        %2160 = vmatprep.subr.mxu0 0.0
        %2161 = vmatpush2.msra.mxu0 0.0
        %2162 = vmatprep.subr.mxu0 0.0
        %2163 = vmatpush2.msra.mxu0 0.0
        %2164 = vmatprep.subr.mxu0 0.0
        %2165 = vmatpush2.msra.mxu0 0.0
        %2166 = vmatprep.subr.mxu0 0.0
        %2167 = vmatpush2.msra.mxu0 0.0
        %2168 = vmatprep.subr.mxu0 0.0
        %2169 = vmatpush2.msra.mxu0 0.0
        %2170 = vmatprep.subr.mxu0 0.0
        %2171 = vmatpush2.msra.mxu0 0.0
        %2172 = vmatprep.subr.mxu0 0.0
        %2173 = vmatpush2.msra.mxu0 0.0
        %2174 = vmatprep.mubr.f32.mxu0 0.0
        %2175 = vmatmul.mubr.f32.gmra.mxu0 %v2108
        %v2176 = vpop.f32.mrf.mxu0
        %v2177 = vadd.f32 %v2104, %v2176
        %v2178 = vpop.f32.mrf.mxu0
        %2179 = vdwg.mxu0
        %2180 = vst [vmem:[%s481] sm:$0xff] %v2177
        %s2181 = sand.u32 %s203, 1
        %s2182 = scalar_lea.sflag [#allocation4], %s2181
        %s2183 = sand.u32 %s203, 1
        %s2184 = smul.addr %s2183, 8
        %s2185 = scalar_lea.vmem [#allocation3], %s2184
        // Predicated region
        $region76: #{recognition_forward.1} parent=70 // pred_check
          %p2186 = pneg %p213
        $region77: #{recognition_forward.1} parent=70 // pred_check_branch
          %2188 = sbr.rel (%p2186) target = $region79
        $region78: #{recognition_forward.1} parent=70 // pred_region
          %s2190 = ssub.s32 128, 128
          %2191 = vsyncadd %s2182, %s2190
          %s2192 = smul.addr %s22, 128
          %s2193 = scalar_lea.hbm %s8, %s2192
          %s2195 = sshll.u32 %s2185, 4
          %s2196 = int_to_ptr.vmem [resolvable:$true] %s2195
          %2198 = dma.vmem_to_hbm [thread:$0]  %s2196, 128, %s2193, %s2182
        $region79: #{recognition_forward.1} parent=70 // pred_fallthru
          _
      $region71: #{recognition_forward.1} parent=5 // pred_fallthru
        _
      %p2199 = scmp.le.s32.totalorder 2, %s17
      // Predicated region
      $region80: #{recognition_forward.1} parent=5 // pred_check
        %p2200 = pneg %p2199
      $region81: #{recognition_forward.1} parent=5 // pred_check_branch
        %2202 = sbr.rel (%p2200) target = $region83
      $region82: #{recognition_forward.1} parent=5 // pred_region
        %s2203 = ssub.s32 %s17, 2
        // Predicated region
        $region84: #{recognition_forward.1} parent=82 // pred_check
          %p2204 = pneg %p219
        $region85: #{recognition_forward.1} parent=82 // pred_check_branch
          %2206 = sbr.rel (%p2204) target = $region87
        $region86: #{recognition_forward.1} parent=82 // pred_region
          %s2207 = sand.u32 %s204, 1
          %s2208 = scalar_lea.sflag [#allocation4], %s2207
          %s2209 = sand.u32 %s204, 1
          %s2210 = smul.addr %s2209, 8
          %s2211 = scalar_lea.vmem [#allocation3], %s2210
          %2212 = dma.done %s2208, 128
        $region87: #{recognition_forward.1} parent=82 // pred_fallthru
          _
      $region83: #{recognition_forward.1} parent=5 // pred_fallthru
        _
    $region6: #{recognition_forward.1} parent=1 // loop_footer
      %s21 = sadd.s32 1, %s17
    $region7: #{recognition_forward.1} parent=1 // loop_footer_branch
      %16 = sbr.rel target = $region3
    $region8: #{recognition_forward.1} parent=1 // loop_exit
      _
    %2213 = vsyncpa [#allocation4], 1
    %s2214 = scalar_lea.sflag [#allocation4], 1
    %2215 = vsyncpa %s2214, 1

</llo_original>
